<compile_context>
chip_gen: v7x
topology: tpu7x:2x2x1
jax: 0.10.0
libtpu: 0.0.40
codegen_flags: <defaults>
</compile_context>

<pallas_src>
import functools

import jax
import jax.numpy as jnp
from jax.experimental import pallas as pl
from jax.experimental.pallas import tpu as pltpu


def _round_up(x, m):
    return (x + m - 1) // m * m


def _residual_block_kernel(x_ref, w1_ref, b1_ref, w2_ref, b2_ref, o_ref,
                           xpad_ref, hpad_ref, *,
                           L, C, K1, K2, TB,
                           pad_l1, off1, L1, L1p,
                           pad_l2, off2, L2p, compute_dtype):
    """Fused Conv1d(K1,P1)->ReLU->Conv1d(K2,P2)->(+x)->ReLU for TB batch rows.

    x_ref:   (TB, C, L)        input block, original torch layout
    w*_ref:  (K, Cin, Cout)    pre-transposed conv weights (compute dtype)
    b*_ref:  (1, C)            biases (f32)
    o_ref:   (TB, C, L)        output block
    xpad_ref:(TB, Lpad, C) f32 scratch: zero-padded, channels-last x
    hpad_ref:(TB, Lscr, C) f32 scratch: zero-padded conv1 output
    """
    Lpad = xpad_ref.shape[1]
    Lscr = hpad_ref.shape[1]

    # --- zero only the small padding borders (interiors are fully rewritten
    # below).  Done every grid step so it stays correct when the "parallel"
    # batch axis is sharded across TensorCores (v7x megacore). ---------------
    xpad_ref[:, :pad_l1, :] = jnp.zeros((TB, pad_l1, C), xpad_ref.dtype)
    xpad_ref[:, pad_l1 + L:, :] = jnp.zeros((TB, Lpad - pad_l1 - L, C),
                                            xpad_ref.dtype)
    hpad_ref[:, :pad_l2, :] = jnp.zeros((TB, pad_l2, C), hpad_ref.dtype)
    hpad_ref[:, pad_l2 + L1:, :] = jnp.zeros((TB, Lscr - pad_l2 - L1, C),
                                             hpad_ref.dtype)

    # --- (C, L) -> (L, C) per batch element into the length-padded scratch:
    # channels land on the lane axis so every conv tap is a plain MXU matmul.
    for b in range(TB):
        xpad_ref[b, pad_l1:pad_l1 + L, :] = x_ref[b].T.astype(xpad_ref.dtype)

    # --- conv1: batch-folded tap matmuls (one MXU push per tap, all TB batch
    # rows folded into M), bf16 operands, f32 accumulation. -------------------
    acc1 = jnp.zeros((TB * L1p, C), jnp.float32)
    for t in range(K1):
        sl = (xpad_ref[:, off1 + t:off1 + t + L1p, :]
              .reshape(TB * L1p, C).astype(compute_dtype))
        acc1 = acc1 + jnp.dot(sl, w1_ref[t],
                              preferred_element_type=jnp.float32)
    h = jnp.maximum(acc1 + b1_ref[...], 0.0)                  # ReLU

    # --- zero-pad conv1 output along length via the persistent scratch ------
    h3 = h.reshape(TB, L1p, C)
    hpad_ref[:, pad_l2:pad_l2 + L1, :] = h3[:, :L1, :]

    # --- conv2 ----------------------------------------------------------------
    acc2 = jnp.zeros((TB * L2p, C), jnp.float32)
    for t in range(K2):
        sl = (hpad_ref[:, off2 + t:off2 + t + L2p, :]
              .reshape(TB * L2p, C).astype(compute_dtype))
        acc2 = acc2 + jnp.dot(sl, w2_ref[t],
                              preferred_element_type=jnp.float32)
    y = (acc2 + b2_ref[...]).reshape(TB, L2p, C)

    # --- residual add + final ReLU; back to the (C, L) layout for the store --
    x_res = xpad_ref[:, pad_l1:pad_l1 + L, :]                 # exact copy of x
    out = jnp.maximum(x_res + y[:, :L, :], 0.0)
    for b in range(TB):
        o_ref[b] = out[b].T.astype(o_ref.dtype)


def residual_block(x, w1, b1, w2, b2, *, padding1=4, padding2=5,
                   compute_dtype=jnp.bfloat16, max_batch_tile=32):
    """x: (B, C, L); w1: (C, C, 11); b1: (C,); w2: (C, C, 9); b2: (C,).

    Matches torch ResidualBlock.forward: ReLU(x + conv2(ReLU(conv1(x)))).
    """
    B, C, L = x.shape
    K1, K2 = w1.shape[-1], w2.shape[-1]
    P1, P2 = padding1, padding2
    L1 = L + 2 * P1 - K1 + 1
    L2 = L1 + 2 * P2 - K2 + 1
    assert L2 == L, "kernel sizes / paddings must preserve sequence length"

    # Sublane-aligned scratch geometry (offsets are multiples of 8).
    pad_l1 = _round_up(P1, 8)            # left zero-pad of x inside the scratch
    off1 = pad_l1 - P1                   # conv1 tap base offset
    L1p = _round_up(L1, 8)               # conv1 rows computed (extras discarded)
    Lpad = _round_up(max(pad_l1 + L + P1, off1 + K1 - 1 + L1p), 8)

    pad_l2 = _round_up(P2, 8)
    off2 = pad_l2 - P2
    L2p = _round_up(L2, 8)
    Lscr = _round_up(max(pad_l2 + L1 + P2, off2 + K2 - 1 + L2p), 8)

    # Host-side weight prep (tiny): (Cout, Cin, K) -> (K, Cin, Cout) so the
    # kernel never transposes weights; bf16 operands feed the MXU.
    w1p = jnp.transpose(w1, (2, 1, 0)).astype(compute_dtype)
    w2p = jnp.transpose(w2, (2, 1, 0)).astype(compute_dtype)
    b1p = b1.reshape(1, C).astype(jnp.float32)
    b2p = b2.reshape(1, C).astype(jnp.float32)

    # Generation-aware VMEM budget -> batch tile (v7x: 64 MiB/TC vs 128 MiB on
    # v5e/v6e).  Keep the double-buffered IO blocks + scratches well inside it.
    try:
        vmem_cap = pltpu.get_tpu_info().vmem_capacity_bytes
    except Exception:
        vmem_cap = 64 * 1024 * 1024      # conservative (v7x per-TensorCore)
    io_bytes = jnp.dtype(x.dtype).itemsize
    per_batch = (2 * C * L * io_bytes          # x block (double-buffered)
                 + 2 * C * L * io_bytes        # out block (double-buffered)
                 + (Lpad + Lscr) * C * 4)      # f32 scratches
    budget = int(vmem_cap * 0.4)
    TB = max(1, min(B, max_batch_tile, budget // max(per_batch, 1)))
    # Keep >= min(B, 4) grid steps so the "parallel" axis can shard across
    # TensorCores (megacore) and the pipeline overlaps DMA with compute.
    TB = min(TB, pl.cdiv(B, min(B, 4)))
    num_tiles = pl.cdiv(B, TB)
    Bp = num_tiles * TB
    if Bp != B:
        x = jnp.pad(x, ((0, Bp - B), (0, 0), (0, 0)))

    kernel = functools.partial(
        _residual_block_kernel, L=L, C=C, K1=K1, K2=K2, TB=TB,
        pad_l1=pad_l1, off1=off1, L1=L1, L1p=L1p,
        pad_l2=pad_l2, off2=off2, L2p=L2p, compute_dtype=compute_dtype)

    out = pl.pallas_call(
        kernel,
        out_shape=jax.ShapeDtypeStruct((Bp, C, L), x.dtype),
        grid_spec=pltpu.PrefetchScalarGridSpec(
            num_scalar_prefetch=0,
            grid=(num_tiles,),
            in_specs=[
                pl.BlockSpec((TB, C, L), lambda i: (i, 0, 0)),    # x
                pl.BlockSpec((K1, C, C), lambda i: (0, 0, 0)),    # w1
                pl.BlockSpec((1, C), lambda i: (0, 0)),           # b1
                pl.BlockSpec((K2, C, C), lambda i: (0, 0, 0)),    # w2
                pl.BlockSpec((1, C), lambda i: (0, 0)),           # b2
            ],
            out_specs=pl.BlockSpec((TB, C, L), lambda i: (i, 0, 0)),
            scratch_shapes=[
                pltpu.VMEM((TB, Lpad, C), jnp.float32),   # padded x (chan-last)
                pltpu.VMEM((TB, Lscr, C), jnp.float32),   # padded conv1 output
            ],
        ),
        compiler_params=pltpu.CompilerParams(
            dimension_semantics=("parallel",),
            vmem_limit_bytes=int(vmem_cap * 0.85),
        ),
    )(x, w1p, b1p, w2p, b2p)

    return out[:B]                       # drop batch padding, still (B, C, L)


def residual_block_ref(x, w1, b1, w2, b2):
    """Pure-JAX reference matching the PyTorch forward."""
    dn = ("NCH", "OIH", "NCH")
    y = jax.lax.conv_general_dilated(x, w1, window_strides=(1,),
                                     padding=[(4, 4)], dimension_numbers=dn)
    y = jax.nn.relu(y + b1[None, :, None])
    y = jax.lax.conv_general_dilated(y, w2, window_strides=(1,),
                                     padding=[(5, 5)], dimension_numbers=dn)
    y = y + b2[None, :, None]
    return jax.nn.relu(x + y)


if __name__ == "__main__":
    B, C, L = 2, 4, 16    # batch, channels, sequence length
    key = jax.random.PRNGKey(0)
    kx, kw1, kb1, kw2, kb2 = jax.random.split(key, 5)

    x = jax.random.normal(kx, (B, C, L), dtype=jnp.float32)
    # torch.nn.Conv1d-style init: U(-1/sqrt(fan_in), 1/sqrt(fan_in))
    bound1 = 1.0 / (C * 11) ** 0.5
    w1 = jax.random.uniform(kw1, (C, C, 11), jnp.float32, -bound1, bound1)
    b1 = jax.random.uniform(kb1, (C,), jnp.float32, -bound1, bound1)
    bound2 = 1.0 / (C * 9) ** 0.5
    w2 = jax.random.uniform(kw2, (C, C, 9), jnp.float32, -bound2, bound2)
    b2 = jax.random.uniform(kb2, (C,), jnp.float32, -bound2, bound2)

    out = jax.block_until_ready(residual_block(x, w1, b1, w2, b2))
    ref = residual_block_ref(x, w1, b1, w2, b2)

    assert out.shape == (B, C, L)
    # bf16 MXU operands (f32 accumulation) -> relaxed tolerance vs f32 ref.
    max_err = float(jnp.max(jnp.abs(out - ref)))
    assert jnp.allclose(out, ref, atol=3e-2, rtol=3e-2), f"mismatch: {max_err}"

    print("KERNEL_OK")
</pallas_src>

<mosaic_0001>
module attributes {stable_mosaic.version = 11 : i64} {
  func.func @_residual_block_kernel(%arg0: i32, %arg1: memref<1x4x16xf32, #tpu.memory_space<vmem>>, %arg2: memref<11x4x4xbf16, #tpu.memory_space<vmem>>, %arg3: memref<1x4xf32, #tpu.memory_space<vmem>>, %arg4: memref<9x4x4xbf16, #tpu.memory_space<vmem>>, %arg5: memref<1x4xf32, #tpu.memory_space<vmem>>, %arg6: memref<1x4x16xf32, #tpu.memory_space<vmem>>, %arg7: memref<1x32x4xf32, #tpu.memory_space<vmem>>, %arg8: memref<1x32x4xf32, #tpu.memory_space<vmem>>) attributes {dimension_semantics = [#tpu.dimension_semantics<parallel>], iteration_bounds = array<i64: 2>, scalar_prefetch = 0 : i64, scratch_operands = 2 : i64, tpu.core_type = #tpu.core_type<tc>, window_params = [{transform_indices = @transform_0, window_bounds = array<i64: 1, 4, 16>}, {pipeline_mode = #tpu.pipeline_mode<synchronous>, transform_indices = @transform_1, window_bounds = array<i64: 11, 4, 4>}, {pipeline_mode = #tpu.pipeline_mode<synchronous>, transform_indices = @transform_2, window_bounds = array<i64: 1, 4>}, {pipeline_mode = #tpu.pipeline_mode<synchronous>, transform_indices = @transform_3, window_bounds = array<i64: 9, 4, 4>}, {pipeline_mode = #tpu.pipeline_mode<synchronous>, transform_indices = @transform_4, window_bounds = array<i64: 1, 4>}, {transform_indices = @transform_5, window_bounds = array<i64: 1, 4, 16>}]} {
    %cst = arith.constant 0.000000e+00 : f32
    %0 = vector.broadcast %cst : f32 to vector<1x8x4xf32>
    %c0 = arith.constant 0 : index
    %c0_0 = arith.constant 0 : index
    %c0_1 = arith.constant 0 : index
    %1 = vector.load %arg7[%c0, %c0_0, %c0_1] : memref<1x32x4xf32, #tpu.memory_space<vmem>>, vector<1x8x4xf32>
    tpu.vector_store %arg7[%c0, %c0_0, %c0_1], %0 {strides = array<i32>} : memref<1x32x4xf32, #tpu.memory_space<vmem>>, vector<1x8x4xf32>,
    %cst_2 = arith.constant 0.000000e+00 : f32
    %2 = vector.broadcast %cst_2 : f32 to vector<1x8x4xf32>
    %c0_3 = arith.constant 0 : index
    %c24 = arith.constant 24 : index
    %c0_4 = arith.constant 0 : index
    %3 = vector.load %arg7[%c0_3, %c24, %c0_4] : memref<1x32x4xf32, #tpu.memory_space<vmem>>, vector<1x8x4xf32>
    tpu.vector_store %arg7[%c0_3, %c24, %c0_4], %2 {strides = array<i32>} : memref<1x32x4xf32, #tpu.memory_space<vmem>>, vector<1x8x4xf32>,
    %cst_5 = arith.constant 0.000000e+00 : f32
    %4 = vector.broadcast %cst_5 : f32 to vector<1x8x4xf32>
    %c0_6 = arith.constant 0 : index
    %c0_7 = arith.constant 0 : index
    %c0_8 = arith.constant 0 : index
    %5 = vector.load %arg8[%c0_6, %c0_7, %c0_8] : memref<1x32x4xf32, #tpu.memory_space<vmem>>, vector<1x8x4xf32>
    tpu.vector_store %arg8[%c0_6, %c0_7, %c0_8], %4 {strides = array<i32>} : memref<1x32x4xf32, #tpu.memory_space<vmem>>, vector<1x8x4xf32>,
    %cst_9 = arith.constant 0.000000e+00 : f32
    %6 = vector.broadcast %cst_9 : f32 to vector<1x10x4xf32>
    %c0_10 = arith.constant 0 : index
    %c22 = arith.constant 22 : index
    %c0_11 = arith.constant 0 : index
    %7 = vector.load %arg8[%c0_10, %c22, %c0_11] : memref<1x32x4xf32, #tpu.memory_space<vmem>>, vector<1x10x4xf32>
    tpu.vector_store %arg8[%c0_10, %c22, %c0_11], %6 {strides = array<i32>} : memref<1x32x4xf32, #tpu.memory_space<vmem>>, vector<1x10x4xf32>,
    %c0_12 = arith.constant 0 : index
    %c0_13 = arith.constant 0 : index
    %c0_14 = arith.constant 0 : index
    %8 = vector.load %arg1[%c0_12, %c0_13, %c0_14] : memref<1x4x16xf32, #tpu.memory_space<vmem>>, vector<1x4x16xf32>
    %9 = vector.shape_cast %8 : vector<1x4x16xf32> to vector<4x16xf32>
    %10 = tpu.transpose %9, [1, 0] : vector<4x16xf32> -> vector<16x4xf32>
    %c0_15 = arith.constant 0 : index
    %c8 = arith.constant 8 : index
    %c0_16 = arith.constant 0 : index
    %11 = vector.load %arg7[%c0_15, %c8, %c0_16] : memref<1x32x4xf32, #tpu.memory_space<vmem>>, vector<1x16x4xf32>
    %12 = vector.shape_cast %11 : vector<1x16x4xf32> to vector<16x4xf32>
    %13 = vector.shape_cast %10 : vector<16x4xf32> to vector<1x16x4xf32>
    tpu.vector_store %arg7[%c0_15, %c8, %c0_16], %13 {strides = array<i32>} : memref<1x32x4xf32, #tpu.memory_space<vmem>>, vector<1x16x4xf32>,
    %cst_17 = arith.constant 0.000000e+00 : f32
    %14 = vector.broadcast %cst_17 : f32 to vector<16x4xf32>
    %c0_18 = arith.constant 0 : index
    %c4 = arith.constant 4 : index
    %c0_19 = arith.constant 0 : index
    %15 = vector.load %arg7[%c0_18, %c4, %c0_19] : memref<1x32x4xf32, #tpu.memory_space<vmem>>, vector<1x16x4xf32>
    %16 = vector.shape_cast %15 : vector<1x16x4xf32> to vector<16x4xf32>
    %17 = arith.truncf %16 : vector<16x4xf32> to vector<16x4xbf16>
    %c0_20 = arith.constant 0 : index
    %c0_21 = arith.constant 0 : index
    %c0_22 = arith.constant 0 : index
    %18 = vector.load %arg2[%c0_20, %c0_21, %c0_22] : memref<11x4x4xbf16, #tpu.memory_space<vmem>>, vector<1x4x4xbf16>
    %19 = vector.shape_cast %18 : vector<1x4x4xbf16> to vector<4x4xbf16>
    %cst_23 = arith.constant dense<0.000000e+00> : vector<16x4xf32>
    %20 = tpu.matmul %17, %19, %cst_23 {dimension_numbers = #tpu.dot_dimension_numbers<[1], [0], [0], [1], [0, 0, 1, 1], [], []>} : vector<16x4xbf16>, vector<4x4xbf16>, vector<16x4xf32> -> vector<16x4xf32>
    %21 = arith.addf %14, %20 : vector<16x4xf32>
    %c0_24 = arith.constant 0 : index
    %c5 = arith.constant 5 : index
    %c0_25 = arith.constant 0 : index
    %22 = vector.load %arg7[%c0_24, %c5, %c0_25] : memref<1x32x4xf32, #tpu.memory_space<vmem>>, vector<1x16x4xf32>
    %23 = vector.shape_cast %22 : vector<1x16x4xf32> to vector<16x4xf32>
    %24 = arith.truncf %23 : vector<16x4xf32> to vector<16x4xbf16>
    %c1 = arith.constant 1 : index
    %c0_26 = arith.constant 0 : index
    %c0_27 = arith.constant 0 : index
    %25 = vector.load %arg2[%c1, %c0_26, %c0_27] : memref<11x4x4xbf16, #tpu.memory_space<vmem>>, vector<1x4x4xbf16>
    %26 = vector.shape_cast %25 : vector<1x4x4xbf16> to vector<4x4xbf16>
    %cst_28 = arith.constant dense<0.000000e+00> : vector<16x4xf32>
    %27 = tpu.matmul %24, %26, %cst_28 {dimension_numbers = #tpu.dot_dimension_numbers<[1], [0], [0], [1], [0, 0, 1, 1], [], []>} : vector<16x4xbf16>, vector<4x4xbf16>, vector<16x4xf32> -> vector<16x4xf32>
    %28 = arith.addf %21, %27 : vector<16x4xf32>
    %c0_29 = arith.constant 0 : index
    %c6 = arith.constant 6 : index
    %c0_30 = arith.constant 0 : index
    %29 = vector.load %arg7[%c0_29, %c6, %c0_30] : memref<1x32x4xf32, #tpu.memory_space<vmem>>, vector<1x16x4xf32>
    %30 = vector.shape_cast %29 : vector<1x16x4xf32> to vector<16x4xf32>
    %31 = arith.truncf %30 : vector<16x4xf32> to vector<16x4xbf16>
    %c2 = arith.constant 2 : index
    %c0_31 = arith.constant 0 : index
    %c0_32 = arith.constant 0 : index
    %32 = vector.load %arg2[%c2, %c0_31, %c0_32] : memref<11x4x4xbf16, #tpu.memory_space<vmem>>, vector<1x4x4xbf16>
    %33 = vector.shape_cast %32 : vector<1x4x4xbf16> to vector<4x4xbf16>
    %cst_33 = arith.constant dense<0.000000e+00> : vector<16x4xf32>
    %34 = tpu.matmul %31, %33, %cst_33 {dimension_numbers = #tpu.dot_dimension_numbers<[1], [0], [0], [1], [0, 0, 1, 1], [], []>} : vector<16x4xbf16>, vector<4x4xbf16>, vector<16x4xf32> -> vector<16x4xf32>
    %35 = arith.addf %28, %34 : vector<16x4xf32>
    %c0_34 = arith.constant 0 : index
    %c7 = arith.constant 7 : index
    %c0_35 = arith.constant 0 : index
    %36 = vector.load %arg7[%c0_34, %c7, %c0_35] : memref<1x32x4xf32, #tpu.memory_space<vmem>>, vector<1x16x4xf32>
    %37 = vector.shape_cast %36 : vector<1x16x4xf32> to vector<16x4xf32>
    %38 = arith.truncf %37 : vector<16x4xf32> to vector<16x4xbf16>
    %c3 = arith.constant 3 : index
    %c0_36 = arith.constant 0 : index
    %c0_37 = arith.constant 0 : index
    %39 = vector.load %arg2[%c3, %c0_36, %c0_37] : memref<11x4x4xbf16, #tpu.memory_space<vmem>>, vector<1x4x4xbf16>
    %40 = vector.shape_cast %39 : vector<1x4x4xbf16> to vector<4x4xbf16>
    %cst_38 = arith.constant dense<0.000000e+00> : vector<16x4xf32>
    %41 = tpu.matmul %38, %40, %cst_38 {dimension_numbers = #tpu.dot_dimension_numbers<[1], [0], [0], [1], [0, 0, 1, 1], [], []>} : vector<16x4xbf16>, vector<4x4xbf16>, vector<16x4xf32> -> vector<16x4xf32>
    %42 = arith.addf %35, %41 : vector<16x4xf32>
    %c0_39 = arith.constant 0 : index
    %c8_40 = arith.constant 8 : index
    %c0_41 = arith.constant 0 : index
    %43 = vector.load %arg7[%c0_39, %c8_40, %c0_41] : memref<1x32x4xf32, #tpu.memory_space<vmem>>, vector<1x16x4xf32>
    %44 = vector.shape_cast %43 : vector<1x16x4xf32> to vector<16x4xf32>
    %45 = arith.truncf %44 : vector<16x4xf32> to vector<16x4xbf16>
    %c4_42 = arith.constant 4 : index
    %c0_43 = arith.constant 0 : index
    %c0_44 = arith.constant 0 : index
    %46 = vector.load %arg2[%c4_42, %c0_43, %c0_44] : memref<11x4x4xbf16, #tpu.memory_space<vmem>>, vector<1x4x4xbf16>
    %47 = vector.shape_cast %46 : vector<1x4x4xbf16> to vector<4x4xbf16>
    %cst_45 = arith.constant dense<0.000000e+00> : vector<16x4xf32>
    %48 = tpu.matmul %45, %47, %cst_45 {dimension_numbers = #tpu.dot_dimension_numbers<[1], [0], [0], [1], [0, 0, 1, 1], [], []>} : vector<16x4xbf16>, vector<4x4xbf16>, vector<16x4xf32> -> vector<16x4xf32>
    %49 = arith.addf %42, %48 : vector<16x4xf32>
    %c0_46 = arith.constant 0 : index
    %c9 = arith.constant 9 : index
    %c0_47 = arith.constant 0 : index
    %50 = vector.load %arg7[%c0_46, %c9, %c0_47] : memref<1x32x4xf32, #tpu.memory_space<vmem>>, vector<1x16x4xf32>
    %51 = vector.shape_cast %50 : vector<1x16x4xf32> to vector<16x4xf32>
    %52 = arith.truncf %51 : vector<16x4xf32> to vector<16x4xbf16>
    %c5_48 = arith.constant 5 : index
    %c0_49 = arith.constant 0 : index
    %c0_50 = arith.constant 0 : index
    %53 = vector.load %arg2[%c5_48, %c0_49, %c0_50] : memref<11x4x4xbf16, #tpu.memory_space<vmem>>, vector<1x4x4xbf16>
    %54 = vector.shape_cast %53 : vector<1x4x4xbf16> to vector<4x4xbf16>
    %cst_51 = arith.constant dense<0.000000e+00> : vector<16x4xf32>
    %55 = tpu.matmul %52, %54, %cst_51 {dimension_numbers = #tpu.dot_dimension_numbers<[1], [0], [0], [1], [0, 0, 1, 1], [], []>} : vector<16x4xbf16>, vector<4x4xbf16>, vector<16x4xf32> -> vector<16x4xf32>
    %56 = arith.addf %49, %55 : vector<16x4xf32>
    %c0_52 = arith.constant 0 : index
    %c10 = arith.constant 10 : index
    %c0_53 = arith.constant 0 : index
    %57 = vector.load %arg7[%c0_52, %c10, %c0_53] : memref<1x32x4xf32, #tpu.memory_space<vmem>>, vector<1x16x4xf32>
    %58 = vector.shape_cast %57 : vector<1x16x4xf32> to vector<16x4xf32>
    %59 = arith.truncf %58 : vector<16x4xf32> to vector<16x4xbf16>
    %c6_54 = arith.constant 6 : index
    %c0_55 = arith.constant 0 : index
    %c0_56 = arith.constant 0 : index
    %60 = vector.load %arg2[%c6_54, %c0_55, %c0_56] : memref<11x4x4xbf16, #tpu.memory_space<vmem>>, vector<1x4x4xbf16>
    %61 = vector.shape_cast %60 : vector<1x4x4xbf16> to vector<4x4xbf16>
    %cst_57 = arith.constant dense<0.000000e+00> : vector<16x4xf32>
    %62 = tpu.matmul %59, %61, %cst_57 {dimension_numbers = #tpu.dot_dimension_numbers<[1], [0], [0], [1], [0, 0, 1, 1], [], []>} : vector<16x4xbf16>, vector<4x4xbf16>, vector<16x4xf32> -> vector<16x4xf32>
    %63 = arith.addf %56, %62 : vector<16x4xf32>
    %c0_58 = arith.constant 0 : index
    %c11 = arith.constant 11 : index
    %c0_59 = arith.constant 0 : index
    %64 = vector.load %arg7[%c0_58, %c11, %c0_59] : memref<1x32x4xf32, #tpu.memory_space<vmem>>, vector<1x16x4xf32>
    %65 = vector.shape_cast %64 : vector<1x16x4xf32> to vector<16x4xf32>
    %66 = arith.truncf %65 : vector<16x4xf32> to vector<16x4xbf16>
    %c7_60 = arith.constant 7 : index
    %c0_61 = arith.constant 0 : index
    %c0_62 = arith.constant 0 : index
    %67 = vector.load %arg2[%c7_60, %c0_61, %c0_62] : memref<11x4x4xbf16, #tpu.memory_space<vmem>>, vector<1x4x4xbf16>
    %68 = vector.shape_cast %67 : vector<1x4x4xbf16> to vector<4x4xbf16>
    %cst_63 = arith.constant dense<0.000000e+00> : vector<16x4xf32>
    %69 = tpu.matmul %66, %68, %cst_63 {dimension_numbers = #tpu.dot_dimension_numbers<[1], [0], [0], [1], [0, 0, 1, 1], [], []>} : vector<16x4xbf16>, vector<4x4xbf16>, vector<16x4xf32> -> vector<16x4xf32>
    %70 = arith.addf %63, %69 : vector<16x4xf32>
    %c0_64 = arith.constant 0 : index
    %c12 = arith.constant 12 : index
    %c0_65 = arith.constant 0 : index
    %71 = vector.load %arg7[%c0_64, %c12, %c0_65] : memref<1x32x4xf32, #tpu.memory_space<vmem>>, vector<1x16x4xf32>
    %72 = vector.shape_cast %71 : vector<1x16x4xf32> to vector<16x4xf32>
    %73 = arith.truncf %72 : vector<16x4xf32> to vector<16x4xbf16>
    %c8_66 = arith.constant 8 : index
    %c0_67 = arith.constant 0 : index
    %c0_68 = arith.constant 0 : index
    %74 = vector.load %arg2[%c8_66, %c0_67, %c0_68] : memref<11x4x4xbf16, #tpu.memory_space<vmem>>, vector<1x4x4xbf16>
    %75 = vector.shape_cast %74 : vector<1x4x4xbf16> to vector<4x4xbf16>
    %cst_69 = arith.constant dense<0.000000e+00> : vector<16x4xf32>
    %76 = tpu.matmul %73, %75, %cst_69 {dimension_numbers = #tpu.dot_dimension_numbers<[1], [0], [0], [1], [0, 0, 1, 1], [], []>} : vector<16x4xbf16>, vector<4x4xbf16>, vector<16x4xf32> -> vector<16x4xf32>
    %77 = arith.addf %70, %76 : vector<16x4xf32>
    %c0_70 = arith.constant 0 : index
    %c13 = arith.constant 13 : index
    %c0_71 = arith.constant 0 : index
    %78 = vector.load %arg7[%c0_70, %c13, %c0_71] : memref<1x32x4xf32, #tpu.memory_space<vmem>>, vector<1x16x4xf32>
    %79 = vector.shape_cast %78 : vector<1x16x4xf32> to vector<16x4xf32>
    %80 = arith.truncf %79 : vector<16x4xf32> to vector<16x4xbf16>
    %c9_72 = arith.constant 9 : index
    %c0_73 = arith.constant 0 : index
    %c0_74 = arith.constant 0 : index
    %81 = vector.load %arg2[%c9_72, %c0_73, %c0_74] : memref<11x4x4xbf16, #tpu.memory_space<vmem>>, vector<1x4x4xbf16>
    %82 = vector.shape_cast %81 : vector<1x4x4xbf16> to vector<4x4xbf16>
    %cst_75 = arith.constant dense<0.000000e+00> : vector<16x4xf32>
    %83 = tpu.matmul %80, %82, %cst_75 {dimension_numbers = #tpu.dot_dimension_numbers<[1], [0], [0], [1], [0, 0, 1, 1], [], []>} : vector<16x4xbf16>, vector<4x4xbf16>, vector<16x4xf32> -> vector<16x4xf32>
    %84 = arith.addf %77, %83 : vector<16x4xf32>
    %c0_76 = arith.constant 0 : index
    %c14 = arith.constant 14 : index
    %c0_77 = arith.constant 0 : index
    %85 = vector.load %arg7[%c0_76, %c14, %c0_77] : memref<1x32x4xf32, #tpu.memory_space<vmem>>, vector<1x16x4xf32>
    %86 = vector.shape_cast %85 : vector<1x16x4xf32> to vector<16x4xf32>
    %87 = arith.truncf %86 : vector<16x4xf32> to vector<16x4xbf16>
    %c10_78 = arith.constant 10 : index
    %c0_79 = arith.constant 0 : index
    %c0_80 = arith.constant 0 : index
    %88 = vector.load %arg2[%c10_78, %c0_79, %c0_80] : memref<11x4x4xbf16, #tpu.memory_space<vmem>>, vector<1x4x4xbf16>
    %89 = vector.shape_cast %88 : vector<1x4x4xbf16> to vector<4x4xbf16>
    %cst_81 = arith.constant dense<0.000000e+00> : vector<16x4xf32>
    %90 = tpu.matmul %87, %89, %cst_81 {dimension_numbers = #tpu.dot_dimension_numbers<[1], [0], [0], [1], [0, 0, 1, 1], [], []>} : vector<16x4xbf16>, vector<4x4xbf16>, vector<16x4xf32> -> vector<16x4xf32>
    %91 = arith.addf %84, %90 : vector<16x4xf32>
    %c0_82 = arith.constant 0 : index
    %c0_83 = arith.constant 0 : index
    %92 = vector.load %arg3[%c0_82, %c0_83] : memref<1x4xf32, #tpu.memory_space<vmem>>, vector<1x4xf32>
    %93 = vector.broadcast %92 : vector<1x4xf32> to vector<16x4xf32>
    %94 = arith.addf %91, %93 : vector<16x4xf32>
    %cst_84 = arith.constant 0.000000e+00 : f32
    %95 = vector.broadcast %cst_84 : f32 to vector<16x4xf32>
    %96 = arith.maximumf %94, %95 : vector<16x4xf32>
    %97 = vector.shape_cast %96 : vector<16x4xf32> to vector<1x16x4xf32>
    %98 = vector.extract_strided_slice %97 {offsets = [0, 0, 0], sizes = [1, 14, 4], strides = [1, 1, 1]} : vector<1x16x4xf32> to vector<1x14x4xf32>
    %c0_85 = arith.constant 0 : index
    %c8_86 = arith.constant 8 : index
    %c0_87 = arith.constant 0 : index
    %99 = vector.load %arg8[%c0_85, %c8_86, %c0_87] : memref<1x32x4xf32, #tpu.memory_space<vmem>>, vector<1x14x4xf32>
    tpu.vector_store %arg8[%c0_85, %c8_86, %c0_87], %98 {strides = array<i32>} : memref<1x32x4xf32, #tpu.memory_space<vmem>>, vector<1x14x4xf32>,
    %cst_88 = arith.constant 0.000000e+00 : f32
    %100 = vector.broadcast %cst_88 : f32 to vector<16x4xf32>
    %c0_89 = arith.constant 0 : index
    %c3_90 = arith.constant 3 : index
    %c0_91 = arith.constant 0 : index
    %101 = vector.load %arg8[%c0_89, %c3_90, %c0_91] : memref<1x32x4xf32, #tpu.memory_space<vmem>>, vector<1x16x4xf32>
    %102 = vector.shape_cast %101 : vector<1x16x4xf32> to vector<16x4xf32>
    %103 = arith.truncf %102 : vector<16x4xf32> to vector<16x4xbf16>
    %c0_92 = arith.constant 0 : index
    %c0_93 = arith.constant 0 : index
    %c0_94 = arith.constant 0 : index
    %104 = vector.load %arg4[%c0_92, %c0_93, %c0_94] : memref<9x4x4xbf16, #tpu.memory_space<vmem>>, vector<1x4x4xbf16>
    %105 = vector.shape_cast %104 : vector<1x4x4xbf16> to vector<4x4xbf16>
    %cst_95 = arith.constant dense<0.000000e+00> : vector<16x4xf32>
    %106 = tpu.matmul %103, %105, %cst_95 {dimension_numbers = #tpu.dot_dimension_numbers<[1], [0], [0], [1], [0, 0, 1, 1], [], []>} : vector<16x4xbf16>, vector<4x4xbf16>, vector<16x4xf32> -> vector<16x4xf32>
    %107 = arith.addf %100, %106 : vector<16x4xf32>
    %c0_96 = arith.constant 0 : index
    %c4_97 = arith.constant 4 : index
    %c0_98 = arith.constant 0 : index
    %108 = vector.load %arg8[%c0_96, %c4_97, %c0_98] : memref<1x32x4xf32, #tpu.memory_space<vmem>>, vector<1x16x4xf32>
    %109 = vector.shape_cast %108 : vector<1x16x4xf32> to vector<16x4xf32>
    %110 = arith.truncf %109 : vector<16x4xf32> to vector<16x4xbf16>
    %c1_99 = arith.constant 1 : index
    %c0_100 = arith.constant 0 : index
    %c0_101 = arith.constant 0 : index
    %111 = vector.load %arg4[%c1_99, %c0_100, %c0_101] : memref<9x4x4xbf16, #tpu.memory_space<vmem>>, vector<1x4x4xbf16>
    %112 = vector.shape_cast %111 : vector<1x4x4xbf16> to vector<4x4xbf16>
    %cst_102 = arith.constant dense<0.000000e+00> : vector<16x4xf32>
    %113 = tpu.matmul %110, %112, %cst_102 {dimension_numbers = #tpu.dot_dimension_numbers<[1], [0], [0], [1], [0, 0, 1, 1], [], []>} : vector<16x4xbf16>, vector<4x4xbf16>, vector<16x4xf32> -> vector<16x4xf32>
    %114 = arith.addf %107, %113 : vector<16x4xf32>
    %c0_103 = arith.constant 0 : index
    %c5_104 = arith.constant 5 : index
    %c0_105 = arith.constant 0 : index
    %115 = vector.load %arg8[%c0_103, %c5_104, %c0_105] : memref<1x32x4xf32, #tpu.memory_space<vmem>>, vector<1x16x4xf32>
    %116 = vector.shape_cast %115 : vector<1x16x4xf32> to vector<16x4xf32>
    %117 = arith.truncf %116 : vector<16x4xf32> to vector<16x4xbf16>
    %c2_106 = arith.constant 2 : index
    %c0_107 = arith.constant 0 : index
    %c0_108 = arith.constant 0 : index
    %118 = vector.load %arg4[%c2_106, %c0_107, %c0_108] : memref<9x4x4xbf16, #tpu.memory_space<vmem>>, vector<1x4x4xbf16>
    %119 = vector.shape_cast %118 : vector<1x4x4xbf16> to vector<4x4xbf16>
    %cst_109 = arith.constant dense<0.000000e+00> : vector<16x4xf32>
    %120 = tpu.matmul %117, %119, %cst_109 {dimension_numbers = #tpu.dot_dimension_numbers<[1], [0], [0], [1], [0, 0, 1, 1], [], []>} : vector<16x4xbf16>, vector<4x4xbf16>, vector<16x4xf32> -> vector<16x4xf32>
    %121 = arith.addf %114, %120 : vector<16x4xf32>
    %c0_110 = arith.constant 0 : index
    %c6_111 = arith.constant 6 : index
    %c0_112 = arith.constant 0 : index
    %122 = vector.load %arg8[%c0_110, %c6_111, %c0_112] : memref<1x32x4xf32, #tpu.memory_space<vmem>>, vector<1x16x4xf32>
    %123 = vector.shape_cast %122 : vector<1x16x4xf32> to vector<16x4xf32>
    %124 = arith.truncf %123 : vector<16x4xf32> to vector<16x4xbf16>
    %c3_113 = arith.constant 3 : index
    %c0_114 = arith.constant 0 : index
    %c0_115 = arith.constant 0 : index
    %125 = vector.load %arg4[%c3_113, %c0_114, %c0_115] : memref<9x4x4xbf16, #tpu.memory_space<vmem>>, vector<1x4x4xbf16>
    %126 = vector.shape_cast %125 : vector<1x4x4xbf16> to vector<4x4xbf16>
    %cst_116 = arith.constant dense<0.000000e+00> : vector<16x4xf32>
    %127 = tpu.matmul %124, %126, %cst_116 {dimension_numbers = #tpu.dot_dimension_numbers<[1], [0], [0], [1], [0, 0, 1, 1], [], []>} : vector<16x4xbf16>, vector<4x4xbf16>, vector<16x4xf32> -> vector<16x4xf32>
    %128 = arith.addf %121, %127 : vector<16x4xf32>
    %c0_117 = arith.constant 0 : index
    %c7_118 = arith.constant 7 : index
    %c0_119 = arith.constant 0 : index
    %129 = vector.load %arg8[%c0_117, %c7_118, %c0_119] : memref<1x32x4xf32, #tpu.memory_space<vmem>>, vector<1x16x4xf32>
    %130 = vector.shape_cast %129 : vector<1x16x4xf32> to vector<16x4xf32>
    %131 = arith.truncf %130 : vector<16x4xf32> to vector<16x4xbf16>
    %c4_120 = arith.constant 4 : index
    %c0_121 = arith.constant 0 : index
    %c0_122 = arith.constant 0 : index
    %132 = vector.load %arg4[%c4_120, %c0_121, %c0_122] : memref<9x4x4xbf16, #tpu.memory_space<vmem>>, vector<1x4x4xbf16>
    %133 = vector.shape_cast %132 : vector<1x4x4xbf16> to vector<4x4xbf16>
    %cst_123 = arith.constant dense<0.000000e+00> : vector<16x4xf32>
    %134 = tpu.matmul %131, %133, %cst_123 {dimension_numbers = #tpu.dot_dimension_numbers<[1], [0], [0], [1], [0, 0, 1, 1], [], []>} : vector<16x4xbf16>, vector<4x4xbf16>, vector<16x4xf32> -> vector<16x4xf32>
    %135 = arith.addf %128, %134 : vector<16x4xf32>
    %c0_124 = arith.constant 0 : index
    %c8_125 = arith.constant 8 : index
    %c0_126 = arith.constant 0 : index
    %136 = vector.load %arg8[%c0_124, %c8_125, %c0_126] : memref<1x32x4xf32, #tpu.memory_space<vmem>>, vector<1x16x4xf32>
    %137 = vector.shape_cast %136 : vector<1x16x4xf32> to vector<16x4xf32>
    %138 = arith.truncf %137 : vector<16x4xf32> to vector<16x4xbf16>
    %c5_127 = arith.constant 5 : index
    %c0_128 = arith.constant 0 : index
    %c0_129 = arith.constant 0 : index
    %139 = vector.load %arg4[%c5_127, %c0_128, %c0_129] : memref<9x4x4xbf16, #tpu.memory_space<vmem>>, vector<1x4x4xbf16>
    %140 = vector.shape_cast %139 : vector<1x4x4xbf16> to vector<4x4xbf16>
    %cst_130 = arith.constant dense<0.000000e+00> : vector<16x4xf32>
    %141 = tpu.matmul %138, %140, %cst_130 {dimension_numbers = #tpu.dot_dimension_numbers<[1], [0], [0], [1], [0, 0, 1, 1], [], []>} : vector<16x4xbf16>, vector<4x4xbf16>, vector<16x4xf32> -> vector<16x4xf32>
    %142 = arith.addf %135, %141 : vector<16x4xf32>
    %c0_131 = arith.constant 0 : index
    %c9_132 = arith.constant 9 : index
    %c0_133 = arith.constant 0 : index
    %143 = vector.load %arg8[%c0_131, %c9_132, %c0_133] : memref<1x32x4xf32, #tpu.memory_space<vmem>>, vector<1x16x4xf32>
    %144 = vector.shape_cast %143 : vector<1x16x4xf32> to vector<16x4xf32>
    %145 = arith.truncf %144 : vector<16x4xf32> to vector<16x4xbf16>
    %c6_134 = arith.constant 6 : index
    %c0_135 = arith.constant 0 : index
    %c0_136 = arith.constant 0 : index
    %146 = vector.load %arg4[%c6_134, %c0_135, %c0_136] : memref<9x4x4xbf16, #tpu.memory_space<vmem>>, vector<1x4x4xbf16>
    %147 = vector.shape_cast %146 : vector<1x4x4xbf16> to vector<4x4xbf16>
    %cst_137 = arith.constant dense<0.000000e+00> : vector<16x4xf32>
    %148 = tpu.matmul %145, %147, %cst_137 {dimension_numbers = #tpu.dot_dimension_numbers<[1], [0], [0], [1], [0, 0, 1, 1], [], []>} : vector<16x4xbf16>, vector<4x4xbf16>, vector<16x4xf32> -> vector<16x4xf32>
    %149 = arith.addf %142, %148 : vector<16x4xf32>
    %c0_138 = arith.constant 0 : index
    %c10_139 = arith.constant 10 : index
    %c0_140 = arith.constant 0 : index
    %150 = vector.load %arg8[%c0_138, %c10_139, %c0_140] : memref<1x32x4xf32, #tpu.memory_space<vmem>>, vector<1x16x4xf32>
    %151 = vector.shape_cast %150 : vector<1x16x4xf32> to vector<16x4xf32>
    %152 = arith.truncf %151 : vector<16x4xf32> to vector<16x4xbf16>
    %c7_141 = arith.constant 7 : index
    %c0_142 = arith.constant 0 : index
    %c0_143 = arith.constant 0 : index
    %153 = vector.load %arg4[%c7_141, %c0_142, %c0_143] : memref<9x4x4xbf16, #tpu.memory_space<vmem>>, vector<1x4x4xbf16>
    %154 = vector.shape_cast %153 : vector<1x4x4xbf16> to vector<4x4xbf16>
    %cst_144 = arith.constant dense<0.000000e+00> : vector<16x4xf32>
    %155 = tpu.matmul %152, %154, %cst_144 {dimension_numbers = #tpu.dot_dimension_numbers<[1], [0], [0], [1], [0, 0, 1, 1], [], []>} : vector<16x4xbf16>, vector<4x4xbf16>, vector<16x4xf32> -> vector<16x4xf32>
    %156 = arith.addf %149, %155 : vector<16x4xf32>
    %c0_145 = arith.constant 0 : index
    %c11_146 = arith.constant 11 : index
    %c0_147 = arith.constant 0 : index
    %157 = vector.load %arg8[%c0_145, %c11_146, %c0_147] : memref<1x32x4xf32, #tpu.memory_space<vmem>>, vector<1x16x4xf32>
    %158 = vector.shape_cast %157 : vector<1x16x4xf32> to vector<16x4xf32>
    %159 = arith.truncf %158 : vector<16x4xf32> to vector<16x4xbf16>
    %c8_148 = arith.constant 8 : index
    %c0_149 = arith.constant 0 : index
    %c0_150 = arith.constant 0 : index
    %160 = vector.load %arg4[%c8_148, %c0_149, %c0_150] : memref<9x4x4xbf16, #tpu.memory_space<vmem>>, vector<1x4x4xbf16>
    %161 = vector.shape_cast %160 : vector<1x4x4xbf16> to vector<4x4xbf16>
    %cst_151 = arith.constant dense<0.000000e+00> : vector<16x4xf32>
    %162 = tpu.matmul %159, %161, %cst_151 {dimension_numbers = #tpu.dot_dimension_numbers<[1], [0], [0], [1], [0, 0, 1, 1], [], []>} : vector<16x4xbf16>, vector<4x4xbf16>, vector<16x4xf32> -> vector<16x4xf32>
    %163 = arith.addf %156, %162 : vector<16x4xf32>
    %c0_152 = arith.constant 0 : index
    %c0_153 = arith.constant 0 : index
    %164 = vector.load %arg5[%c0_152, %c0_153] : memref<1x4xf32, #tpu.memory_space<vmem>>, vector<1x4xf32>
    %165 = vector.broadcast %164 : vector<1x4xf32> to vector<16x4xf32>
    %166 = arith.addf %163, %165 : vector<16x4xf32>
    %167 = vector.shape_cast %166 : vector<16x4xf32> to vector<1x16x4xf32>
    %c0_154 = arith.constant 0 : index
    %c8_155 = arith.constant 8 : index
    %c0_156 = arith.constant 0 : index
    %168 = vector.load %arg7[%c0_154, %c8_155, %c0_156] : memref<1x32x4xf32, #tpu.memory_space<vmem>>, vector<1x16x4xf32>
    %169 = arith.addf %168, %167 : vector<1x16x4xf32>
    %cst_157 = arith.constant 0.000000e+00 : f32
    %170 = vector.broadcast %cst_157 : f32 to vector<1x16x4xf32>
    %171 = arith.maximumf %169, %170 : vector<1x16x4xf32>
    %172 = vector.shape_cast %171 : vector<1x16x4xf32> to vector<16x4xf32>
    %173 = tpu.transpose %172, [1, 0] : vector<16x4xf32> -> vector<4x16xf32>
    %c0_158 = arith.constant 0 : index
    %c0_159 = arith.constant 0 : index
    %c0_160 = arith.constant 0 : index
    %174 = vector.load %arg6[%c0_158, %c0_159, %c0_160] : memref<1x4x16xf32, #tpu.memory_space<vmem>>, vector<1x4x16xf32>
    %175 = vector.shape_cast %174 : vector<1x4x16xf32> to vector<4x16xf32>
    %176 = vector.shape_cast %173 : vector<4x16xf32> to vector<1x4x16xf32>
    tpu.vector_store %arg6[%c0_158, %c0_159, %c0_160], %176 {strides = array<i32>} : memref<1x4x16xf32, #tpu.memory_space<vmem>>, vector<1x4x16xf32>,
    return
  }
  func.func @transform_0(%arg0: i32) -> (i32, i32, i32) {
    %c0_i32 = arith.constant 0 : i32
    %c0_i32_0 = arith.constant 0 : i32
    %c0_i32_1 = arith.constant 0 : i32
    return %arg0, %c0_i32, %c0_i32_0 : i32, i32, i32
  }
  func.func @transform_1(%arg0: i32) -> (i32, i32, i32) {
    %c0_i32 = arith.constant 0 : i32
    %c0_i32_0 = arith.constant 0 : i32
    %c0_i32_1 = arith.constant 0 : i32
    %c0_i32_2 = arith.constant 0 : i32
    return %c0_i32, %c0_i32_0, %c0_i32_1 : i32, i32, i32
  }
  func.func @transform_2(%arg0: i32) -> (i32, i32) {
    %c0_i32 = arith.constant 0 : i32
    %c0_i32_0 = arith.constant 0 : i32
    %c0_i32_1 = arith.constant 0 : i32
    return %c0_i32, %c0_i32_0 : i32, i32
  }
  func.func @transform_3(%arg0: i32) -> (i32, i32, i32) {
    %c0_i32 = arith.constant 0 : i32
    %c0_i32_0 = arith.constant 0 : i32
    %c0_i32_1 = arith.constant 0 : i32
    %c0_i32_2 = arith.constant 0 : i32
    return %c0_i32, %c0_i32_0, %c0_i32_1 : i32, i32, i32
  }
  func.func @transform_4(%arg0: i32) -> (i32, i32) {
    %c0_i32 = arith.constant 0 : i32
    %c0_i32_0 = arith.constant 0 : i32
    %c0_i32_1 = arith.constant 0 : i32
    return %c0_i32, %c0_i32_0 : i32, i32
  }
  func.func @transform_5(%arg0: i32) -> (i32, i32, i32) {
    %c0_i32 = arith.constant 0 : i32
    %c0_i32_0 = arith.constant 0 : i32
    %c0_i32_1 = arith.constant 0 : i32
    return %arg0, %c0_i32, %c0_i32_0 : i32, i32, i32
  }
}

</mosaic_0001>

<llo_original>
// kernel: tpu_custom_call.1
$region0: #{tpu_custom_call.1}
  #allocation0 [shape = 'u32[]', space=smem, size = 0x4, offset = 0x4, fixed_abs, tag = 'smem constant byte address 0x4 - core index']
  #allocation1 [shape = 'u32[144,128]{1,0:T(1,128)}', space=vmem, size = 0x12000, scoped, tag = 'internal scratch']
  #allocation2 [shape = 'f32[1,32,4]{2,1,0:T(8,128)}', space=vmem, size = 0x4000, scoped, tag = 'scratch operand']
  #allocation3 [shape = 'f32[1,32,4]{2,1,0:T(8,128)}', space=vmem, size = 0x4000, scoped, tag = 'scratch operand']
  %s0 = inlined_call_operand.vmem [shape: f32[2,4,16], index: 0, kind: input, shape index: {}]
  %s1 = inlined_call_operand.vmem [shape: bf16[11,4,4], index: 1, kind: input, shape index: {}]
  %s2 = inlined_call_operand.vmem [shape: f32[1,4], index: 2, kind: input, shape index: {}]
  %s3 = inlined_call_operand.vmem [shape: bf16[9,4,4], index: 3, kind: input, shape index: {}]
  %s4 = inlined_call_operand.vmem [shape: f32[1,4], index: 4, kind: input, shape index: {}]
  %s5 = inlined_call_operand.hbm [shape: f32[2,4,16], index: 5, kind: output, shape index: {}]
  %s6 = sld [smem:[#allocation0]]
  $region53: #{tpu_custom_call.1} parent=0
    _
  %s8 = ssub.s32 1, %s6
  %s9 = scalar_select 0, %s8, %s6
  $region1: #{tpu_custom_call.1} parent=0
    #allocation4 [shape = 'u8[4096]{0}', space=vmem, size = 0x1000, scoped, tag = 'output window, operand 0']
    #allocation5 [shape = 's32[2]{0}', space=sflag, size = 0x8, scoped, tag = 'scoped memory for tpu_custom_call.1']
    %10 = vsyncpa [#allocation5], 0
    %s11 = scalar_lea.sflag [#allocation5], 1
    %12 = vsyncpa %s11, 0
    loop: start=0, step=1, limit=4
    $region2: #{tpu_custom_call.1} parent=1 // loop_pre_header
      _
    $region3: #{tpu_custom_call.1} parent=1 // loop_header
      %s14 = sphi 0, %s18
      %p15 = scmp.ge.s32.totalorder %s14, 4
      %s24 = sphi 0, %s26
      %s27 = sphi 0, %s24
      %s28 = sphi 0, %s27
      %s44 = sphi 0, %s28
      %s48 = sphi 0, %s48
      %s50 = sphi 0, %s48
      %s51 = sphi 0, %s50
      %s65 = sphi 0, %s51
      %s69 = sphi 0, %s69
      %s71 = sphi 0, %s69
      %s72 = sphi 0, %s71
      %s86 = sphi 0, %s72
      %s90 = sphi 0, %s90
      %s92 = sphi 0, %s90
      %s93 = sphi 0, %s92
      %s107 = sphi 0, %s93
      %s111 = sphi 0, %s111
      %s113 = sphi 0, %s111
      %s114 = sphi 0, %s113
      %s128 = sphi 0, %s114
      %s134 = sphi 0, %s136
      %s137 = sphi 0, %s134
      %s138 = sphi 0, %s137
      %s154 = sphi 0, %s138
    $region4: #{tpu_custom_call.1} parent=1 // loop_header_branch
      %17 = sbr.rel (%p15) target = $region8
    $region5: #{tpu_custom_call.1} parent=1 // loop_body
      %s19 = ssub.s32 %s14, 1
      %s20 = ssub.s32 %s14, 2
      %s21 = sadd.s32 %s14, 1
      %s22 = ssub.s32 %s14, %s21
      %p23 = scmp.eq.s32.totalorder %s22, 0
      %s25 = sadd.s32 %s24, 1
      %s26 = scalar_select %p23, %s24, %s25
      %p29 = pneg %p23
      %p30 = scmp.eq.s32.totalorder %s14, 1
      %p31 = por %p29, %p30
      %p32 = scmp.ne.s32.totalorder %s24, %s27
      %p33 = scmp.eq.s32.totalorder %s14, 0
      %p34 = por %p32, %p33
      %p35 = scmp.ne.s32.totalorder %s24, %s27
      %p36 = scmp.eq.s32.totalorder %s19, 1
      %p37 = por %p35, %p36
      %p38 = scmp.ne.s32.totalorder %s27, %s28
      %p39 = scmp.eq.s32.totalorder %s19, 0
      %p40 = por %p38, %p39
      %p41 = scmp.ne.s32.totalorder %s27, %s28
      %p42 = scmp.eq.s32.totalorder %s20, 1
      %p43 = por %p41, %p42
      %p45 = scmp.ne.s32.totalorder %s28, %s44
      %p46 = scmp.eq.s32.totalorder %s20, 0
      %p47 = por %p45, %p46
      %s49 = sadd.s32 %s48, 1
      %p52 = scmp.eq.s32.totalorder %s14, 1
      %p53 = scmp.ne.s32.totalorder %s48, %s50
      %p54 = scmp.eq.s32.totalorder %s14, 0
      %p55 = por %p53, %p54
      %p56 = scmp.ne.s32.totalorder %s48, %s50
      %p57 = scmp.eq.s32.totalorder %s19, 1
      %p58 = por %p56, %p57
      %p59 = scmp.ne.s32.totalorder %s50, %s51
      %p60 = scmp.eq.s32.totalorder %s19, 0
      %p61 = por %p59, %p60
      %p62 = scmp.ne.s32.totalorder %s50, %s51
      %p63 = scmp.eq.s32.totalorder %s20, 1
      %p64 = por %p62, %p63
      %p66 = scmp.ne.s32.totalorder %s51, %s65
      %p67 = scmp.eq.s32.totalorder %s20, 0
      %p68 = por %p66, %p67
      %s70 = sadd.s32 %s69, 1
      %p73 = scmp.eq.s32.totalorder %s14, 1
      %p74 = scmp.ne.s32.totalorder %s69, %s71
      %p75 = scmp.eq.s32.totalorder %s14, 0
      %p76 = por %p74, %p75
      %p77 = scmp.ne.s32.totalorder %s69, %s71
      %p78 = scmp.eq.s32.totalorder %s19, 1
      %p79 = por %p77, %p78
      %p80 = scmp.ne.s32.totalorder %s71, %s72
      %p81 = scmp.eq.s32.totalorder %s19, 0
      %p82 = por %p80, %p81
      %p83 = scmp.ne.s32.totalorder %s71, %s72
      %p84 = scmp.eq.s32.totalorder %s20, 1
      %p85 = por %p83, %p84
      %p87 = scmp.ne.s32.totalorder %s72, %s86
      %p88 = scmp.eq.s32.totalorder %s20, 0
      %p89 = por %p87, %p88
      %s91 = sadd.s32 %s90, 1
      %p94 = scmp.eq.s32.totalorder %s14, 1
      %p95 = scmp.ne.s32.totalorder %s90, %s92
      %p96 = scmp.eq.s32.totalorder %s14, 0
      %p97 = por %p95, %p96
      %p98 = scmp.ne.s32.totalorder %s90, %s92
      %p99 = scmp.eq.s32.totalorder %s19, 1
      %p100 = por %p98, %p99
      %p101 = scmp.ne.s32.totalorder %s92, %s93
      %p102 = scmp.eq.s32.totalorder %s19, 0
      %p103 = por %p101, %p102
      %p104 = scmp.ne.s32.totalorder %s92, %s93
      %p105 = scmp.eq.s32.totalorder %s20, 1
      %p106 = por %p104, %p105
      %p108 = scmp.ne.s32.totalorder %s93, %s107
      %p109 = scmp.eq.s32.totalorder %s20, 0
      %p110 = por %p108, %p109
      %s112 = sadd.s32 %s111, 1
      %p115 = scmp.eq.s32.totalorder %s14, 1
      %p116 = scmp.ne.s32.totalorder %s111, %s113
      %p117 = scmp.eq.s32.totalorder %s14, 0
      %p118 = por %p116, %p117
      %p119 = scmp.ne.s32.totalorder %s111, %s113
      %p120 = scmp.eq.s32.totalorder %s19, 1
      %p121 = por %p119, %p120
      %p122 = scmp.ne.s32.totalorder %s113, %s114
      %p123 = scmp.eq.s32.totalorder %s19, 0
      %p124 = por %p122, %p123
      %p125 = scmp.ne.s32.totalorder %s113, %s114
      %p126 = scmp.eq.s32.totalorder %s20, 1
      %p127 = por %p125, %p126
      %p129 = scmp.ne.s32.totalorder %s114, %s128
      %p130 = scmp.eq.s32.totalorder %s20, 0
      %p131 = por %p129, %p130
      %s132 = ssub.s32 %s14, %s21
      %p133 = scmp.eq.s32.totalorder %s132, 0
      %s135 = sadd.s32 %s134, 1
      %s136 = scalar_select %p133, %s134, %s135
      %p139 = pneg %p133
      %p140 = scmp.eq.s32.totalorder %s14, 1
      %p141 = por %p139, %p140
      %p142 = scmp.ne.s32.totalorder %s134, %s137
      %p143 = scmp.eq.s32.totalorder %s14, 0
      %p144 = por %p142, %p143
      %p145 = scmp.ne.s32.totalorder %s134, %s137
      %p146 = scmp.eq.s32.totalorder %s19, 1
      %p147 = por %p145, %p146
      %p148 = scmp.ne.s32.totalorder %s137, %s138
      %p149 = scmp.eq.s32.totalorder %s19, 0
      %p150 = por %p148, %p149
      %p151 = scmp.ne.s32.totalorder %s137, %s138
      %p152 = scmp.eq.s32.totalorder %s20, 1
      %p153 = por %p151, %p152
      %p155 = scmp.ne.s32.totalorder %s138, %s154
      %p156 = scmp.eq.s32.totalorder %s20, 0
      %p157 = por %p155, %p156
      %p158 = scmp.le.s32.totalorder 1, %s14
      %p159 = scmp.lt.s32.totalorder %s14, 3
      %p160 = pnand %p158, %p159
      %p161 = pneg %p160
      // Predicated region
      $region9: #{tpu_custom_call.1} parent=5 // pred_check
        _
      $region10: #{tpu_custom_call.1} parent=5 // pred_check_branch
        %163 = sbr.rel (%p160) target = $region12
      $region11: #{tpu_custom_call.1} parent=5 // pred_region
        %s164 = ssub.s32 %s14, 1
        // Predicated region
        $region13: #{tpu_custom_call.1} parent=11 // pred_check
          %p165 = pneg %p61
        $region14: #{tpu_custom_call.1} parent=11 // pred_check_branch
          %167 = sbr.rel (%p165) target = $region16
        $region15: #{tpu_custom_call.1} parent=11 // pred_region
          _
        $region16: #{tpu_custom_call.1} parent=11 // pred_fallthru
          _
        // Predicated region
        $region17: #{tpu_custom_call.1} parent=11 // pred_check
          %p168 = pneg %p82
        $region18: #{tpu_custom_call.1} parent=11 // pred_check_branch
          %170 = sbr.rel (%p168) target = $region20
        $region19: #{tpu_custom_call.1} parent=11 // pred_region
          _
        $region20: #{tpu_custom_call.1} parent=11 // pred_fallthru
          _
        // Predicated region
        $region21: #{tpu_custom_call.1} parent=11 // pred_check
          %p171 = pneg %p103
        $region22: #{tpu_custom_call.1} parent=11 // pred_check_branch
          %173 = sbr.rel (%p171) target = $region24
        $region23: #{tpu_custom_call.1} parent=11 // pred_region
          _
        $region24: #{tpu_custom_call.1} parent=11 // pred_fallthru
          _
        // Predicated region
        $region25: #{tpu_custom_call.1} parent=11 // pred_check
          %p174 = pneg %p124
        $region26: #{tpu_custom_call.1} parent=11 // pred_check_branch
          %176 = sbr.rel (%p174) target = $region28
        $region27: #{tpu_custom_call.1} parent=11 // pred_region
          _
        $region28: #{tpu_custom_call.1} parent=11 // pred_fallthru
          _
      $region12: #{tpu_custom_call.1} parent=5 // pred_fallthru
        _
      %p177 = scmp.lt.s32.totalorder %s14, 2
      // Predicated region
      $region29: #{tpu_custom_call.1} parent=5 // pred_check
        %p178 = pneg %p177
      $region30: #{tpu_custom_call.1} parent=5 // pred_check_branch
        %180 = sbr.rel (%p178) target = $region32
      $region31: #{tpu_custom_call.1} parent=5 // pred_region
        // Predicated region
        $region33: #{tpu_custom_call.1} parent=31 // pred_check
          %p181 = pneg %p34
        $region34: #{tpu_custom_call.1} parent=31 // pred_check_branch
          %183 = sbr.rel (%p181) target = $region36
        $region35: #{tpu_custom_call.1} parent=31 // pred_region
          %p184 = scmp.lt.s32.totalorder %s14, 1
          %s185 = scalar_select %p184, %s14, 1
          %s186 = smul.addr %s185, 4
          %s187 = scalar_lea.vmem %s0, %s186
        $region36: #{tpu_custom_call.1} parent=31 // pred_fallthru
          _
      $region32: #{tpu_custom_call.1} parent=5 // pred_fallthru
        _
      %p188 = scmp.le.s32.totalorder 1, %s14
      %p189 = scmp.lt.s32.totalorder %s14, 3
      %p190 = pnand %p188, %p189
      %p191 = pneg %p190
      // Predicated region
      $region37: #{tpu_custom_call.1} parent=5 // pred_check
        _
      $region38: #{tpu_custom_call.1} parent=5 // pred_check_branch
        %193 = sbr.rel (%p190) target = $region40
      $region39: #{tpu_custom_call.1} parent=5 // pred_region
        %s194 = ssub.s32 %s14, 1
        %p195 = scmp.lt.s32.totalorder %s19, 1
        %s196 = scalar_select %p195, %s19, 1
        %s197 = smul.addr %s196, 4
        %s198 = scalar_lea.vmem %s0, %s197
        %p199 = pneg %p40
        %p200 = pneg %p37
        %p201 = pneg %p61
        %p202 = pneg %p58
        %p203 = pneg %p82
        %p204 = pneg %p79
        %p205 = pneg %p103
        %p206 = pneg %p100
        %p207 = pneg %p124
        %p208 = pneg %p121
        %p209 = pneg %p150
        %p210 = pneg %p147
        %s211 = sand.u32 %s137, 1
        %s212 = scalar_lea.sflag [#allocation5], %s211
        %s213 = sand.u32 %s137, 1
        %s214 = smul.addr %s213, 4
        %s215 = scalar_lea.vmem [#allocation4], %s214
        %p216 = scmp.lt.s32.totalorder %s19, 1
        %s217 = scalar_select %p216, %s19, 1
        %s218 = smul.addr %s217, 4
        %s219 = scalar_lea.vmem %s0, %s218
        %vm221 = vcmask 31744
        %222 = vst.msk [vmem:[#allocation2] sm:$0xff] %vm221, 0.0
        %223 = vst.msk [vmem:[#allocation2 + $0x18] sm:$0xff] %vm221, 0.0
        %224 = vst.msk [vmem:[#allocation3] sm:$0xff] %vm221, 0.0
        %225 = vst.msk [vmem:[#allocation3 + $0x16] sm:$0xff] %vm221, 0.0
        %vm226 = vcmask 25600
        %227 = vst.msk [vmem:[#allocation3 + $0x1e] sm:$0x3] %vm226, 0.0
        %v228 = vld [vmem:[%s219] sm:$0xf]
        %229 = vxpose.xlu0.b32.start [1/16] %v228, 128
        %230 = vxpose.xlu0.b32.cont [2/16] 0.0, 128
        %231 = vxpose.xlu0.b32.cont [3/16] 0.0, 128
        %232 = vxpose.xlu0.b32.cont [4/16] 0.0, 128
        %233 = vxpose.xlu0.b32.cont [5/16] 0.0, 128
        %234 = vxpose.xlu0.b32.cont [6/16] 0.0, 128
        %235 = vxpose.xlu0.b32.cont [7/16] 0.0, 128
        %236 = vxpose.xlu0.b32.cont [8/16] 0.0, 128
        %237 = vxpose.xlu0.b32.cont [9/16] 0.0, 128
        %238 = vxpose.xlu0.b32.cont [10/16] 0.0, 128
        %239 = vxpose.xlu0.b32.cont [11/16] 0.0, 128
        %240 = vxpose.xlu0.b32.cont [12/16] 0.0, 128
        %241 = vxpose.xlu0.b32.cont [13/16] 0.0, 128
        %242 = vxpose.xlu0.b32.cont [14/16] 0.0, 128
        %243 = vxpose.xlu0.b32.cont [15/16] 0.0, 128
        %244 = vxpose.xlu0.b32.end [16/16] 0.0, 128
        %v245 = vpop.trf.xlu0
        %v246 = vpop.trf.xlu0
        %v247 = vpop.trf.xlu0
        %v248 = vpop.trf.xlu0
        %v249 = vpop.trf.xlu0
        %v250 = vpop.trf.xlu0
        %v251 = vpop.trf.xlu0
        %v252 = vpop.trf.xlu0
        %v253 = vpop.trf.xlu0
        %v254 = vpop.trf.xlu0
        %v255 = vpop.trf.xlu0
        %v256 = vpop.trf.xlu0
        %v257 = vpop.trf.xlu0
        %v258 = vpop.trf.xlu0
        %v259 = vpop.trf.xlu0
        %v260 = vpop.trf.xlu0
        %261 = vst.msk [vmem:[#allocation2 + $0x8] sm:$0xff] %vm221, %v245
        %262 = vst.msk [vmem:[#allocation2 + $0x10] sm:$0xff] %vm221, %v246
        %v263 = vld [vmem:[#allocation2 + $0x4] sm:$0xff]
        %v264 = vld [vmem:[#allocation2 + $0xc] sm:$0xff]
        %v265 = vpack.c.bf16 %v264, %v263
        %v266 = vld [vmem:[%s1] sm:$0x3]
        %v267 = vld [vmem:[#allocation2 + $0x5] sm:$0xff]
        %v268 = vld [vmem:[#allocation2 + $0xd] sm:$0xff]
        %v269 = vpack.c.bf16 %v268, %v267
        %s270 = scalar_lea.vmem %s1, 2
        %v271 = vld [vmem:[%s270] sm:$0x3]
        %v273 = vsel %vm221, %v269, 0
        %vm275 = vcmask 1041408
        %v277 = vsel %vm275, %v271, 0
        %279 = vmatprep.subr.bf16.mxu0 0
        %280 = vmatpush1.bf16.msra.mxu0 %v277
        %281 = vmatprep.subr.bf16.mxu0 0
        %282 = vmatpush1.bf16.msra.mxu0 0
        %283 = vmatprep.subr.bf16.mxu0 0
        %284 = vmatpush1.bf16.msra.mxu0 0
        %285 = vmatprep.subr.bf16.mxu0 0
        %286 = vmatpush1.bf16.msra.mxu0 0
        %287 = vmatprep.subr.bf16.mxu0 0
        %288 = vmatpush1.bf16.msra.mxu0 0
        %289 = vmatprep.subr.bf16.mxu0 0
        %290 = vmatpush1.bf16.msra.mxu0 0
        %291 = vmatprep.subr.bf16.mxu0 0
        %292 = vmatpush1.bf16.msra.mxu0 0
        %293 = vmatprep.subr.bf16.mxu0 0
        %294 = vmatpush1.bf16.msra.mxu0 0
        %295 = vmatprep.subr.bf16.mxu0 0
        %296 = vmatpush1.bf16.msra.mxu0 0
        %297 = vmatprep.subr.bf16.mxu0 0
        %298 = vmatpush1.bf16.msra.mxu0 0
        %299 = vmatprep.subr.bf16.mxu0 0
        %300 = vmatpush1.bf16.msra.mxu0 0
        %301 = vmatprep.subr.bf16.mxu0 0
        %302 = vmatpush1.bf16.msra.mxu0 0
        %303 = vmatprep.subr.bf16.mxu0 0
        %304 = vmatpush1.bf16.msra.mxu0 0
        %305 = vmatprep.subr.bf16.mxu0 0
        %306 = vmatpush1.bf16.msra.mxu0 0
        %307 = vmatprep.subr.bf16.mxu0 0
        %308 = vmatpush1.bf16.msra.mxu0 0
        %309 = vmatprep.subr.bf16.mxu0 0
        %310 = vmatpush1.bf16.msra.mxu0 0
        %311 = vmatprep.mubr.bf16.mxu0 0
        %312 = vmatmul.mubr.bf16.gmra.mrb[0].mxu0 %v273
        %v313 = vpop.f32.mrb[0].mxu0
        %v314 = vadd.f32 0.0, %v313
        %v315 = vpop.f32.mrb[0].mxu0
        %v316 = vpop.f32.mrb[0].mxu0
        %v317 = vadd.f32 0.0, %v316
        %v318 = vpop.f32.mrb[0].mxu0
        %319 = vdwg.mxu0
        %v321 = vsel %vm221, %v265, 0
        %v324 = vsel %vm275, %v266, 0
        %326 = vmatprep.subr.bf16.mxu0 0
        %327 = vmatpush1.bf16.msra.mxu0 %v324
        %328 = vmatprep.subr.bf16.mxu0 0
        %329 = vmatpush1.bf16.msra.mxu0 0
        %330 = vmatprep.subr.bf16.mxu0 0
        %331 = vmatpush1.bf16.msra.mxu0 0
        %332 = vmatprep.subr.bf16.mxu0 0
        %333 = vmatpush1.bf16.msra.mxu0 0
        %334 = vmatprep.subr.bf16.mxu0 0
        %335 = vmatpush1.bf16.msra.mxu0 0
        %336 = vmatprep.subr.bf16.mxu0 0
        %337 = vmatpush1.bf16.msra.mxu0 0
        %338 = vmatprep.subr.bf16.mxu0 0
        %339 = vmatpush1.bf16.msra.mxu0 0
        %340 = vmatprep.subr.bf16.mxu0 0
        %341 = vmatpush1.bf16.msra.mxu0 0
        %342 = vmatprep.subr.bf16.mxu0 0
        %343 = vmatpush1.bf16.msra.mxu0 0
        %344 = vmatprep.subr.bf16.mxu0 0
        %345 = vmatpush1.bf16.msra.mxu0 0
        %346 = vmatprep.subr.bf16.mxu0 0
        %347 = vmatpush1.bf16.msra.mxu0 0
        %348 = vmatprep.subr.bf16.mxu0 0
        %349 = vmatpush1.bf16.msra.mxu0 0
        %350 = vmatprep.subr.bf16.mxu0 0
        %351 = vmatpush1.bf16.msra.mxu0 0
        %352 = vmatprep.subr.bf16.mxu0 0
        %353 = vmatpush1.bf16.msra.mxu0 0
        %354 = vmatprep.subr.bf16.mxu0 0
        %355 = vmatpush1.bf16.msra.mxu0 0
        %356 = vmatprep.subr.bf16.mxu0 0
        %357 = vmatpush1.bf16.msra.mxu0 0
        %358 = vmatprep.mubr.bf16.mxu0 0
        %359 = vmatmul.mubr.bf16.gmra.mrb[0].mxu0 %v321
        %v360 = vpop.f32.mrb[0].mxu0
        %v361 = vadd.f32 %v314, %v360
        %v362 = vpop.f32.mrb[0].mxu0
        %v363 = vpop.f32.mrb[0].mxu0
        %v364 = vadd.f32 %v317, %v363
        %v365 = vpop.f32.mrb[0].mxu0
        %366 = vdwg.mxu0
        %v367 = vld [vmem:[#allocation2 + $0x6] sm:$0xff]
        %v368 = vld [vmem:[#allocation2 + $0xe] sm:$0xff]
        %v369 = vpack.c.bf16 %v368, %v367
        %s370 = scalar_lea.vmem %s1, 4
        %v371 = vld [vmem:[%s370] sm:$0x3]
        %v373 = vsel %vm221, %v369, 0
        %v376 = vsel %vm275, %v371, 0
        %378 = vmatprep.subr.bf16.mxu0 0
        %379 = vmatpush1.bf16.msra.mxu0 %v376
        %380 = vmatprep.subr.bf16.mxu0 0
        %381 = vmatpush1.bf16.msra.mxu0 0
        %382 = vmatprep.subr.bf16.mxu0 0
        %383 = vmatpush1.bf16.msra.mxu0 0
        %384 = vmatprep.subr.bf16.mxu0 0
        %385 = vmatpush1.bf16.msra.mxu0 0
        %386 = vmatprep.subr.bf16.mxu0 0
        %387 = vmatpush1.bf16.msra.mxu0 0
        %388 = vmatprep.subr.bf16.mxu0 0
        %389 = vmatpush1.bf16.msra.mxu0 0
        %390 = vmatprep.subr.bf16.mxu0 0
        %391 = vmatpush1.bf16.msra.mxu0 0
        %392 = vmatprep.subr.bf16.mxu0 0
        %393 = vmatpush1.bf16.msra.mxu0 0
        %394 = vmatprep.subr.bf16.mxu0 0
        %395 = vmatpush1.bf16.msra.mxu0 0
        %396 = vmatprep.subr.bf16.mxu0 0
        %397 = vmatpush1.bf16.msra.mxu0 0
        %398 = vmatprep.subr.bf16.mxu0 0
        %399 = vmatpush1.bf16.msra.mxu0 0
        %400 = vmatprep.subr.bf16.mxu0 0
        %401 = vmatpush1.bf16.msra.mxu0 0
        %402 = vmatprep.subr.bf16.mxu0 0
        %403 = vmatpush1.bf16.msra.mxu0 0
        %404 = vmatprep.subr.bf16.mxu0 0
        %405 = vmatpush1.bf16.msra.mxu0 0
        %406 = vmatprep.subr.bf16.mxu0 0
        %407 = vmatpush1.bf16.msra.mxu0 0
        %408 = vmatprep.subr.bf16.mxu0 0
        %409 = vmatpush1.bf16.msra.mxu0 0
        %410 = vmatprep.mubr.bf16.mxu0 0
        %411 = vmatmul.mubr.bf16.gmra.mrb[0].mxu0 %v373
        %v412 = vpop.f32.mrb[0].mxu0
        %v413 = vadd.f32 0.0, %v412
        %v414 = vpop.f32.mrb[0].mxu0
        %v415 = vpop.f32.mrb[0].mxu0
        %v416 = vadd.f32 0.0, %v415
        %v417 = vpop.f32.mrb[0].mxu0
        %418 = vdwg.mxu0
        %v419 = vadd.f32 %v361, %v413
        %v420 = vadd.f32 %v364, %v416
        %v421 = vld [vmem:[#allocation2 + $0x7] sm:$0xff]
        %v422 = vld [vmem:[#allocation2 + $0xf] sm:$0xff]
        %v423 = vpack.c.bf16 %v422, %v421
        %s424 = scalar_lea.vmem %s1, 6
        %v425 = vld [vmem:[%s424] sm:$0x3]
        %v427 = vsel %vm221, %v423, 0
        %v430 = vsel %vm275, %v425, 0
        %432 = vmatprep.subr.bf16.mxu0 0
        %433 = vmatpush1.bf16.msra.mxu0 %v430
        %434 = vmatprep.subr.bf16.mxu0 0
        %435 = vmatpush1.bf16.msra.mxu0 0
        %436 = vmatprep.subr.bf16.mxu0 0
        %437 = vmatpush1.bf16.msra.mxu0 0
        %438 = vmatprep.subr.bf16.mxu0 0
        %439 = vmatpush1.bf16.msra.mxu0 0
        %440 = vmatprep.subr.bf16.mxu0 0
        %441 = vmatpush1.bf16.msra.mxu0 0
        %442 = vmatprep.subr.bf16.mxu0 0
        %443 = vmatpush1.bf16.msra.mxu0 0
        %444 = vmatprep.subr.bf16.mxu0 0
        %445 = vmatpush1.bf16.msra.mxu0 0
        %446 = vmatprep.subr.bf16.mxu0 0
        %447 = vmatpush1.bf16.msra.mxu0 0
        %448 = vmatprep.subr.bf16.mxu0 0
        %449 = vmatpush1.bf16.msra.mxu0 0
        %450 = vmatprep.subr.bf16.mxu0 0
        %451 = vmatpush1.bf16.msra.mxu0 0
        %452 = vmatprep.subr.bf16.mxu0 0
        %453 = vmatpush1.bf16.msra.mxu0 0
        %454 = vmatprep.subr.bf16.mxu0 0
        %455 = vmatpush1.bf16.msra.mxu0 0
        %456 = vmatprep.subr.bf16.mxu0 0
        %457 = vmatpush1.bf16.msra.mxu0 0
        %458 = vmatprep.subr.bf16.mxu0 0
        %459 = vmatpush1.bf16.msra.mxu0 0
        %460 = vmatprep.subr.bf16.mxu0 0
        %461 = vmatpush1.bf16.msra.mxu0 0
        %462 = vmatprep.subr.bf16.mxu0 0
        %463 = vmatpush1.bf16.msra.mxu0 0
        %464 = vmatprep.mubr.bf16.mxu0 0
        %465 = vmatmul.mubr.bf16.gmra.mrb[0].mxu0 %v427
        %v466 = vpop.f32.mrb[0].mxu0
        %v467 = vadd.f32 0.0, %v466
        %v468 = vpop.f32.mrb[0].mxu0
        %v469 = vpop.f32.mrb[0].mxu0
        %v470 = vadd.f32 0.0, %v469
        %v471 = vpop.f32.mrb[0].mxu0
        %472 = vdwg.mxu0
        %v473 = vadd.f32 %v419, %v467
        %v474 = vadd.f32 %v420, %v470
        %v475 = vld [vmem:[#allocation2 + $0x8] sm:$0xff]
        %v476 = vld [vmem:[#allocation2 + $0x10] sm:$0xff]
        %v477 = vpack.c.bf16 %v476, %v475
        %s478 = scalar_lea.vmem %s1, 8
        %v479 = vld [vmem:[%s478] sm:$0x3]
        %v481 = vsel %vm221, %v477, 0
        %v484 = vsel %vm275, %v479, 0
        %486 = vmatprep.subr.bf16.mxu0 0
        %487 = vmatpush1.bf16.msra.mxu0 %v484
        %488 = vmatprep.subr.bf16.mxu0 0
        %489 = vmatpush1.bf16.msra.mxu0 0
        %490 = vmatprep.subr.bf16.mxu0 0
        %491 = vmatpush1.bf16.msra.mxu0 0
        %492 = vmatprep.subr.bf16.mxu0 0
        %493 = vmatpush1.bf16.msra.mxu0 0
        %494 = vmatprep.subr.bf16.mxu0 0
        %495 = vmatpush1.bf16.msra.mxu0 0
        %496 = vmatprep.subr.bf16.mxu0 0
        %497 = vmatpush1.bf16.msra.mxu0 0
        %498 = vmatprep.subr.bf16.mxu0 0
        %499 = vmatpush1.bf16.msra.mxu0 0
        %500 = vmatprep.subr.bf16.mxu0 0
        %501 = vmatpush1.bf16.msra.mxu0 0
        %502 = vmatprep.subr.bf16.mxu0 0
        %503 = vmatpush1.bf16.msra.mxu0 0
        %504 = vmatprep.subr.bf16.mxu0 0
        %505 = vmatpush1.bf16.msra.mxu0 0
        %506 = vmatprep.subr.bf16.mxu0 0
        %507 = vmatpush1.bf16.msra.mxu0 0
        %508 = vmatprep.subr.bf16.mxu0 0
        %509 = vmatpush1.bf16.msra.mxu0 0
        %510 = vmatprep.subr.bf16.mxu0 0
        %511 = vmatpush1.bf16.msra.mxu0 0
        %512 = vmatprep.subr.bf16.mxu0 0
        %513 = vmatpush1.bf16.msra.mxu0 0
        %514 = vmatprep.subr.bf16.mxu0 0
        %515 = vmatpush1.bf16.msra.mxu0 0
        %516 = vmatprep.subr.bf16.mxu0 0
        %517 = vmatpush1.bf16.msra.mxu0 0
        %518 = vmatprep.mubr.bf16.mxu0 0
        %519 = vmatmul.mubr.bf16.gmra.mrb[0].mxu0 %v481
        %v520 = vpop.f32.mrb[0].mxu0
        %v521 = vadd.f32 0.0, %v520
        %v522 = vpop.f32.mrb[0].mxu0
        %v523 = vpop.f32.mrb[0].mxu0
        %v524 = vadd.f32 0.0, %v523
        %v525 = vpop.f32.mrb[0].mxu0
        %526 = vdwg.mxu0
        %v527 = vadd.f32 %v473, %v521
        %v528 = vadd.f32 %v474, %v524
        %v529 = vld [vmem:[#allocation2 + $0x9] sm:$0xff]
        %v530 = vld [vmem:[#allocation2 + $0x11] sm:$0xff]
        %v531 = vpack.c.bf16 %v530, %v529
        %s532 = scalar_lea.vmem %s1, 10
        %v533 = vld [vmem:[%s532] sm:$0x3]
        %v535 = vsel %vm221, %v531, 0
        %v538 = vsel %vm275, %v533, 0
        %540 = vmatprep.subr.bf16.mxu0 0
        %541 = vmatpush1.bf16.msra.mxu0 %v538
        %542 = vmatprep.subr.bf16.mxu0 0
        %543 = vmatpush1.bf16.msra.mxu0 0
        %544 = vmatprep.subr.bf16.mxu0 0
        %545 = vmatpush1.bf16.msra.mxu0 0
        %546 = vmatprep.subr.bf16.mxu0 0
        %547 = vmatpush1.bf16.msra.mxu0 0
        %548 = vmatprep.subr.bf16.mxu0 0
        %549 = vmatpush1.bf16.msra.mxu0 0
        %550 = vmatprep.subr.bf16.mxu0 0
        %551 = vmatpush1.bf16.msra.mxu0 0
        %552 = vmatprep.subr.bf16.mxu0 0
        %553 = vmatpush1.bf16.msra.mxu0 0
        %554 = vmatprep.subr.bf16.mxu0 0
        %555 = vmatpush1.bf16.msra.mxu0 0
        %556 = vmatprep.subr.bf16.mxu0 0
        %557 = vmatpush1.bf16.msra.mxu0 0
        %558 = vmatprep.subr.bf16.mxu0 0
        %559 = vmatpush1.bf16.msra.mxu0 0
        %560 = vmatprep.subr.bf16.mxu0 0
        %561 = vmatpush1.bf16.msra.mxu0 0
        %562 = vmatprep.subr.bf16.mxu0 0
        %563 = vmatpush1.bf16.msra.mxu0 0
        %564 = vmatprep.subr.bf16.mxu0 0
        %565 = vmatpush1.bf16.msra.mxu0 0
        %566 = vmatprep.subr.bf16.mxu0 0
        %567 = vmatpush1.bf16.msra.mxu0 0
        %568 = vmatprep.subr.bf16.mxu0 0
        %569 = vmatpush1.bf16.msra.mxu0 0
        %570 = vmatprep.subr.bf16.mxu0 0
        %571 = vmatpush1.bf16.msra.mxu0 0
        %572 = vmatprep.mubr.bf16.mxu0 0
        %573 = vmatmul.mubr.bf16.gmra.mrb[0].mxu0 %v535
        %v574 = vpop.f32.mrb[0].mxu0
        %v575 = vadd.f32 0.0, %v574
        %v576 = vpop.f32.mrb[0].mxu0
        %v577 = vpop.f32.mrb[0].mxu0
        %v578 = vadd.f32 0.0, %v577
        %v579 = vpop.f32.mrb[0].mxu0
        %580 = vdwg.mxu0
        %v581 = vadd.f32 %v527, %v575
        %v582 = vadd.f32 %v528, %v578
        %v583 = vld [vmem:[#allocation2 + $0xa] sm:$0xff]
        %v584 = vld [vmem:[#allocation2 + $0x12] sm:$0xff]
        %v585 = vpack.c.bf16 %v584, %v583
        %s586 = scalar_lea.vmem %s1, 12
        %v587 = vld [vmem:[%s586] sm:$0x3]
        %v589 = vsel %vm221, %v585, 0
        %v592 = vsel %vm275, %v587, 0
        %594 = vmatprep.subr.bf16.mxu0 0
        %595 = vmatpush1.bf16.msra.mxu0 %v592
        %596 = vmatprep.subr.bf16.mxu0 0
        %597 = vmatpush1.bf16.msra.mxu0 0
        %598 = vmatprep.subr.bf16.mxu0 0
        %599 = vmatpush1.bf16.msra.mxu0 0
        %600 = vmatprep.subr.bf16.mxu0 0
        %601 = vmatpush1.bf16.msra.mxu0 0
        %602 = vmatprep.subr.bf16.mxu0 0
        %603 = vmatpush1.bf16.msra.mxu0 0
        %604 = vmatprep.subr.bf16.mxu0 0
        %605 = vmatpush1.bf16.msra.mxu0 0
        %606 = vmatprep.subr.bf16.mxu0 0
        %607 = vmatpush1.bf16.msra.mxu0 0
        %608 = vmatprep.subr.bf16.mxu0 0
        %609 = vmatpush1.bf16.msra.mxu0 0
        %610 = vmatprep.subr.bf16.mxu0 0
        %611 = vmatpush1.bf16.msra.mxu0 0
        %612 = vmatprep.subr.bf16.mxu0 0
        %613 = vmatpush1.bf16.msra.mxu0 0
        %614 = vmatprep.subr.bf16.mxu0 0
        %615 = vmatpush1.bf16.msra.mxu0 0
        %616 = vmatprep.subr.bf16.mxu0 0
        %617 = vmatpush1.bf16.msra.mxu0 0
        %618 = vmatprep.subr.bf16.mxu0 0
        %619 = vmatpush1.bf16.msra.mxu0 0
        %620 = vmatprep.subr.bf16.mxu0 0
        %621 = vmatpush1.bf16.msra.mxu0 0
        %622 = vmatprep.subr.bf16.mxu0 0
        %623 = vmatpush1.bf16.msra.mxu0 0
        %624 = vmatprep.subr.bf16.mxu0 0
        %625 = vmatpush1.bf16.msra.mxu0 0
        %626 = vmatprep.mubr.bf16.mxu0 0
        %627 = vmatmul.mubr.bf16.gmra.mrb[0].mxu0 %v589
        %v628 = vpop.f32.mrb[0].mxu0
        %v629 = vadd.f32 0.0, %v628
        %v630 = vpop.f32.mrb[0].mxu0
        %v631 = vpop.f32.mrb[0].mxu0
        %v632 = vadd.f32 0.0, %v631
        %v633 = vpop.f32.mrb[0].mxu0
        %634 = vdwg.mxu0
        %v635 = vadd.f32 %v581, %v629
        %v636 = vadd.f32 %v582, %v632
        %v637 = vld [vmem:[#allocation2 + $0xb] sm:$0xff]
        %v638 = vld [vmem:[#allocation2 + $0x13] sm:$0xff]
        %v639 = vpack.c.bf16 %v638, %v637
        %s640 = scalar_lea.vmem %s1, 14
        %v641 = vld [vmem:[%s640] sm:$0x3]
        %v643 = vsel %vm221, %v639, 0
        %v646 = vsel %vm275, %v641, 0
        %648 = vmatprep.subr.bf16.mxu0 0
        %649 = vmatpush1.bf16.msra.mxu0 %v646
        %650 = vmatprep.subr.bf16.mxu0 0
        %651 = vmatpush1.bf16.msra.mxu0 0
        %652 = vmatprep.subr.bf16.mxu0 0
        %653 = vmatpush1.bf16.msra.mxu0 0
        %654 = vmatprep.subr.bf16.mxu0 0
        %655 = vmatpush1.bf16.msra.mxu0 0
        %656 = vmatprep.subr.bf16.mxu0 0
        %657 = vmatpush1.bf16.msra.mxu0 0
        %658 = vmatprep.subr.bf16.mxu0 0
        %659 = vmatpush1.bf16.msra.mxu0 0
        %660 = vmatprep.subr.bf16.mxu0 0
        %661 = vmatpush1.bf16.msra.mxu0 0
        %662 = vmatprep.subr.bf16.mxu0 0
        %663 = vmatpush1.bf16.msra.mxu0 0
        %664 = vmatprep.subr.bf16.mxu0 0
        %665 = vmatpush1.bf16.msra.mxu0 0
        %666 = vmatprep.subr.bf16.mxu0 0
        %667 = vmatpush1.bf16.msra.mxu0 0
        %668 = vmatprep.subr.bf16.mxu0 0
        %669 = vmatpush1.bf16.msra.mxu0 0
        %670 = vmatprep.subr.bf16.mxu0 0
        %671 = vmatpush1.bf16.msra.mxu0 0
        %672 = vmatprep.subr.bf16.mxu0 0
        %673 = vmatpush1.bf16.msra.mxu0 0
        %674 = vmatprep.subr.bf16.mxu0 0
        %675 = vmatpush1.bf16.msra.mxu0 0
        %676 = vmatprep.subr.bf16.mxu0 0
        %677 = vmatpush1.bf16.msra.mxu0 0
        %678 = vmatprep.subr.bf16.mxu0 0
        %679 = vmatpush1.bf16.msra.mxu0 0
        %680 = vmatprep.mubr.bf16.mxu0 0
        %681 = vmatmul.mubr.bf16.gmra.mrb[0].mxu0 %v643
        %v682 = vpop.f32.mrb[0].mxu0
        %v683 = vadd.f32 0.0, %v682
        %v684 = vpop.f32.mrb[0].mxu0
        %v685 = vpop.f32.mrb[0].mxu0
        %v686 = vadd.f32 0.0, %v685
        %v687 = vpop.f32.mrb[0].mxu0
        %688 = vdwg.mxu0
        %v689 = vadd.f32 %v635, %v683
        %v690 = vadd.f32 %v636, %v686
        %v691 = vld [vmem:[#allocation2 + $0xc] sm:$0xff]
        %v692 = vld [vmem:[#allocation2 + $0x14] sm:$0xff]
        %v693 = vpack.c.bf16 %v692, %v691
        %s694 = scalar_lea.vmem %s1, 16
        %v695 = vld [vmem:[%s694] sm:$0x3]
        %v697 = vsel %vm221, %v693, 0
        %v700 = vsel %vm275, %v695, 0
        %702 = vmatprep.subr.bf16.mxu0 0
        %703 = vmatpush1.bf16.msra.mxu0 %v700
        %704 = vmatprep.subr.bf16.mxu0 0
        %705 = vmatpush1.bf16.msra.mxu0 0
        %706 = vmatprep.subr.bf16.mxu0 0
        %707 = vmatpush1.bf16.msra.mxu0 0
        %708 = vmatprep.subr.bf16.mxu0 0
        %709 = vmatpush1.bf16.msra.mxu0 0
        %710 = vmatprep.subr.bf16.mxu0 0
        %711 = vmatpush1.bf16.msra.mxu0 0
        %712 = vmatprep.subr.bf16.mxu0 0
        %713 = vmatpush1.bf16.msra.mxu0 0
        %714 = vmatprep.subr.bf16.mxu0 0
        %715 = vmatpush1.bf16.msra.mxu0 0
        %716 = vmatprep.subr.bf16.mxu0 0
        %717 = vmatpush1.bf16.msra.mxu0 0
        %718 = vmatprep.subr.bf16.mxu0 0
        %719 = vmatpush1.bf16.msra.mxu0 0
        %720 = vmatprep.subr.bf16.mxu0 0
        %721 = vmatpush1.bf16.msra.mxu0 0
        %722 = vmatprep.subr.bf16.mxu0 0
        %723 = vmatpush1.bf16.msra.mxu0 0
        %724 = vmatprep.subr.bf16.mxu0 0
        %725 = vmatpush1.bf16.msra.mxu0 0
        %726 = vmatprep.subr.bf16.mxu0 0
        %727 = vmatpush1.bf16.msra.mxu0 0
        %728 = vmatprep.subr.bf16.mxu0 0
        %729 = vmatpush1.bf16.msra.mxu0 0
        %730 = vmatprep.subr.bf16.mxu0 0
        %731 = vmatpush1.bf16.msra.mxu0 0
        %732 = vmatprep.subr.bf16.mxu0 0
        %733 = vmatpush1.bf16.msra.mxu0 0
        %734 = vmatprep.mubr.bf16.mxu0 0
        %735 = vmatmul.mubr.bf16.gmra.mrb[0].mxu0 %v697
        %v736 = vpop.f32.mrb[0].mxu0
        %v737 = vadd.f32 0.0, %v736
        %v738 = vpop.f32.mrb[0].mxu0
        %v739 = vpop.f32.mrb[0].mxu0
        %v740 = vadd.f32 0.0, %v739
        %v741 = vpop.f32.mrb[0].mxu0
        %742 = vdwg.mxu0
        %v743 = vadd.f32 %v689, %v737
        %v744 = vadd.f32 %v690, %v740
        %v745 = vld [vmem:[#allocation2 + $0xd] sm:$0xff]
        %v746 = vld [vmem:[#allocation2 + $0x15] sm:$0xff]
        %v747 = vpack.c.bf16 %v746, %v745
        %s748 = scalar_lea.vmem %s1, 18
        %v749 = vld [vmem:[%s748] sm:$0x3]
        %v751 = vsel %vm221, %v747, 0
        %v754 = vsel %vm275, %v749, 0
        %756 = vmatprep.subr.bf16.mxu0 0
        %757 = vmatpush1.bf16.msra.mxu0 %v754
        %758 = vmatprep.subr.bf16.mxu0 0
        %759 = vmatpush1.bf16.msra.mxu0 0
        %760 = vmatprep.subr.bf16.mxu0 0
        %761 = vmatpush1.bf16.msra.mxu0 0
        %762 = vmatprep.subr.bf16.mxu0 0
        %763 = vmatpush1.bf16.msra.mxu0 0
        %764 = vmatprep.subr.bf16.mxu0 0
        %765 = vmatpush1.bf16.msra.mxu0 0
        %766 = vmatprep.subr.bf16.mxu0 0
        %767 = vmatpush1.bf16.msra.mxu0 0
        %768 = vmatprep.subr.bf16.mxu0 0
        %769 = vmatpush1.bf16.msra.mxu0 0
        %770 = vmatprep.subr.bf16.mxu0 0
        %771 = vmatpush1.bf16.msra.mxu0 0
        %772 = vmatprep.subr.bf16.mxu0 0
        %773 = vmatpush1.bf16.msra.mxu0 0
        %774 = vmatprep.subr.bf16.mxu0 0
        %775 = vmatpush1.bf16.msra.mxu0 0
        %776 = vmatprep.subr.bf16.mxu0 0
        %777 = vmatpush1.bf16.msra.mxu0 0
        %778 = vmatprep.subr.bf16.mxu0 0
        %779 = vmatpush1.bf16.msra.mxu0 0
        %780 = vmatprep.subr.bf16.mxu0 0
        %781 = vmatpush1.bf16.msra.mxu0 0
        %782 = vmatprep.subr.bf16.mxu0 0
        %783 = vmatpush1.bf16.msra.mxu0 0
        %784 = vmatprep.subr.bf16.mxu0 0
        %785 = vmatpush1.bf16.msra.mxu0 0
        %786 = vmatprep.subr.bf16.mxu0 0
        %787 = vmatpush1.bf16.msra.mxu0 0
        %788 = vmatprep.mubr.bf16.mxu0 0
        %789 = vmatmul.mubr.bf16.gmra.mrb[0].mxu0 %v751
        %v790 = vpop.f32.mrb[0].mxu0
        %v791 = vadd.f32 0.0, %v790
        %v792 = vpop.f32.mrb[0].mxu0
        %v793 = vpop.f32.mrb[0].mxu0
        %v794 = vadd.f32 0.0, %v793
        %v795 = vpop.f32.mrb[0].mxu0
        %796 = vdwg.mxu0
        %v797 = vadd.f32 %v743, %v791
        %v798 = vadd.f32 %v744, %v794
        %v799 = vld [vmem:[#allocation2 + $0xe] sm:$0xff]
        %v800 = vld [vmem:[#allocation2 + $0x16] sm:$0xff]
        %v801 = vpack.c.bf16 %v800, %v799
        %s802 = scalar_lea.vmem %s1, 20
        %v803 = vld [vmem:[%s802] sm:$0x3]
        %v805 = vsel %vm221, %v801, 0
        %v808 = vsel %vm275, %v803, 0
        %810 = vmatprep.subr.bf16.mxu0 0
        %811 = vmatpush1.bf16.msra.mxu0 %v808
        %812 = vmatprep.subr.bf16.mxu0 0
        %813 = vmatpush1.bf16.msra.mxu0 0
        %814 = vmatprep.subr.bf16.mxu0 0
        %815 = vmatpush1.bf16.msra.mxu0 0
        %816 = vmatprep.subr.bf16.mxu0 0
        %817 = vmatpush1.bf16.msra.mxu0 0
        %818 = vmatprep.subr.bf16.mxu0 0
        %819 = vmatpush1.bf16.msra.mxu0 0
        %820 = vmatprep.subr.bf16.mxu0 0
        %821 = vmatpush1.bf16.msra.mxu0 0
        %822 = vmatprep.subr.bf16.mxu0 0
        %823 = vmatpush1.bf16.msra.mxu0 0
        %824 = vmatprep.subr.bf16.mxu0 0
        %825 = vmatpush1.bf16.msra.mxu0 0
        %826 = vmatprep.subr.bf16.mxu0 0
        %827 = vmatpush1.bf16.msra.mxu0 0
        %828 = vmatprep.subr.bf16.mxu0 0
        %829 = vmatpush1.bf16.msra.mxu0 0
        %830 = vmatprep.subr.bf16.mxu0 0
        %831 = vmatpush1.bf16.msra.mxu0 0
        %832 = vmatprep.subr.bf16.mxu0 0
        %833 = vmatpush1.bf16.msra.mxu0 0
        %834 = vmatprep.subr.bf16.mxu0 0
        %835 = vmatpush1.bf16.msra.mxu0 0
        %836 = vmatprep.subr.bf16.mxu0 0
        %837 = vmatpush1.bf16.msra.mxu0 0
        %838 = vmatprep.subr.bf16.mxu0 0
        %839 = vmatpush1.bf16.msra.mxu0 0
        %840 = vmatprep.subr.bf16.mxu0 0
        %841 = vmatpush1.bf16.msra.mxu0 0
        %842 = vmatprep.mubr.bf16.mxu0 0
        %843 = vmatmul.mubr.bf16.gmra.mrb[0].mxu0 %v805
        %v844 = vpop.f32.mrb[0].mxu0
        %v845 = vadd.f32 0.0, %v844
        %v846 = vpop.f32.mrb[0].mxu0
        %v847 = vpop.f32.mrb[0].mxu0
        %v848 = vadd.f32 0.0, %v847
        %v849 = vpop.f32.mrb[0].mxu0
        %850 = vdwg.mxu0
        %v851 = vadd.f32 %v797, %v845
        %v852 = vadd.f32 %v798, %v848
        %v853 = vld [vmem:[%s2] sm:$0x1]
        %v855 = vlaneseq
        %v856 = vshrl.u32 %v855, 7
        %v857 = vsub.s32 0, %v856
        %v858 = vrot.slane %v853, %v857
        %v860 = vadd.f32 %v851, %v858
        %v861 = vadd.f32 %v852, %v858
        %v862 = vmax.f32 %v860, 0.0
        %v863 = vmax.f32 %v861, 0.0
        %864 = vst.msk [vmem:[#allocation3 + $0x8] sm:$0xff] %vm221, %v862
        %vm865 = vcmask 29696
        %866 = vst.msk [vmem:[#allocation3 + $0x10] sm:$0x3f] %vm865, %v863
        %v867 = vld [vmem:[#allocation3 + $0x3] sm:$0xff]
        %v868 = vld [vmem:[#allocation3 + $0xb] sm:$0xff]
        %v869 = vpack.c.bf16 %v868, %v867
        %v870 = vld [vmem:[%s3] sm:$0x3]
        %v871 = vld [vmem:[#allocation3 + $0x4] sm:$0xff]
        %v872 = vld [vmem:[#allocation3 + $0xc] sm:$0xff]
        %v873 = vpack.c.bf16 %v872, %v871
        %s874 = scalar_lea.vmem %s3, 2
        %v875 = vld [vmem:[%s874] sm:$0x3]
        %v877 = vsel %vm221, %v873, 0
        %v880 = vsel %vm275, %v875, 0
        %882 = vmatprep.subr.bf16.mxu0 0
        %883 = vmatpush1.bf16.msra.mxu0 %v880
        %884 = vmatprep.subr.bf16.mxu0 0
        %885 = vmatpush1.bf16.msra.mxu0 0
        %886 = vmatprep.subr.bf16.mxu0 0
        %887 = vmatpush1.bf16.msra.mxu0 0
        %888 = vmatprep.subr.bf16.mxu0 0
        %889 = vmatpush1.bf16.msra.mxu0 0
        %890 = vmatprep.subr.bf16.mxu0 0
        %891 = vmatpush1.bf16.msra.mxu0 0
        %892 = vmatprep.subr.bf16.mxu0 0
        %893 = vmatpush1.bf16.msra.mxu0 0
        %894 = vmatprep.subr.bf16.mxu0 0
        %895 = vmatpush1.bf16.msra.mxu0 0
        %896 = vmatprep.subr.bf16.mxu0 0
        %897 = vmatpush1.bf16.msra.mxu0 0
        %898 = vmatprep.subr.bf16.mxu0 0
        %899 = vmatpush1.bf16.msra.mxu0 0
        %900 = vmatprep.subr.bf16.mxu0 0
        %901 = vmatpush1.bf16.msra.mxu0 0
        %902 = vmatprep.subr.bf16.mxu0 0
        %903 = vmatpush1.bf16.msra.mxu0 0
        %904 = vmatprep.subr.bf16.mxu0 0
        %905 = vmatpush1.bf16.msra.mxu0 0
        %906 = vmatprep.subr.bf16.mxu0 0
        %907 = vmatpush1.bf16.msra.mxu0 0
        %908 = vmatprep.subr.bf16.mxu0 0
        %909 = vmatpush1.bf16.msra.mxu0 0
        %910 = vmatprep.subr.bf16.mxu0 0
        %911 = vmatpush1.bf16.msra.mxu0 0
        %912 = vmatprep.subr.bf16.mxu0 0
        %913 = vmatpush1.bf16.msra.mxu0 0
        %914 = vmatprep.mubr.bf16.mxu0 0
        %915 = vmatmul.mubr.bf16.gmra.mrb[0].mxu0 %v877
        %v916 = vpop.f32.mrb[0].mxu0
        %v917 = vadd.f32 0.0, %v916
        %v918 = vpop.f32.mrb[0].mxu0
        %v919 = vpop.f32.mrb[0].mxu0
        %v920 = vadd.f32 0.0, %v919
        %v921 = vpop.f32.mrb[0].mxu0
        %922 = vdwg.mxu0
        %v924 = vsel %vm221, %v869, 0
        %v927 = vsel %vm275, %v870, 0
        %929 = vmatprep.subr.bf16.mxu0 0
        %930 = vmatpush1.bf16.msra.mxu0 %v927
        %931 = vmatprep.subr.bf16.mxu0 0
        %932 = vmatpush1.bf16.msra.mxu0 0
        %933 = vmatprep.subr.bf16.mxu0 0
        %934 = vmatpush1.bf16.msra.mxu0 0
        %935 = vmatprep.subr.bf16.mxu0 0
        %936 = vmatpush1.bf16.msra.mxu0 0
        %937 = vmatprep.subr.bf16.mxu0 0
        %938 = vmatpush1.bf16.msra.mxu0 0
        %939 = vmatprep.subr.bf16.mxu0 0
        %940 = vmatpush1.bf16.msra.mxu0 0
        %941 = vmatprep.subr.bf16.mxu0 0
        %942 = vmatpush1.bf16.msra.mxu0 0
        %943 = vmatprep.subr.bf16.mxu0 0
        %944 = vmatpush1.bf16.msra.mxu0 0
        %945 = vmatprep.subr.bf16.mxu0 0
        %946 = vmatpush1.bf16.msra.mxu0 0
        %947 = vmatprep.subr.bf16.mxu0 0
        %948 = vmatpush1.bf16.msra.mxu0 0
        %949 = vmatprep.subr.bf16.mxu0 0
        %950 = vmatpush1.bf16.msra.mxu0 0
        %951 = vmatprep.subr.bf16.mxu0 0
        %952 = vmatpush1.bf16.msra.mxu0 0
        %953 = vmatprep.subr.bf16.mxu0 0
        %954 = vmatpush1.bf16.msra.mxu0 0
        %955 = vmatprep.subr.bf16.mxu0 0
        %956 = vmatpush1.bf16.msra.mxu0 0
        %957 = vmatprep.subr.bf16.mxu0 0
        %958 = vmatpush1.bf16.msra.mxu0 0
        %959 = vmatprep.subr.bf16.mxu0 0
        %960 = vmatpush1.bf16.msra.mxu0 0
        %961 = vmatprep.mubr.bf16.mxu0 0
        %962 = vmatmul.mubr.bf16.gmra.mrb[0].mxu0 %v924
        %v963 = vpop.f32.mrb[0].mxu0
        %v964 = vadd.f32 %v917, %v963
        %v965 = vpop.f32.mrb[0].mxu0
        %v966 = vpop.f32.mrb[0].mxu0
        %v967 = vadd.f32 %v920, %v966
        %v968 = vpop.f32.mrb[0].mxu0
        %969 = vdwg.mxu0
        %v970 = vld [vmem:[#allocation3 + $0x5] sm:$0xff]
        %v971 = vld [vmem:[#allocation3 + $0xd] sm:$0xff]
        %v972 = vpack.c.bf16 %v971, %v970
        %s973 = scalar_lea.vmem %s3, 4
        %v974 = vld [vmem:[%s973] sm:$0x3]
        %v976 = vsel %vm221, %v972, 0
        %v979 = vsel %vm275, %v974, 0
        %981 = vmatprep.subr.bf16.mxu0 0
        %982 = vmatpush1.bf16.msra.mxu0 %v979
        %983 = vmatprep.subr.bf16.mxu0 0
        %984 = vmatpush1.bf16.msra.mxu0 0
        %985 = vmatprep.subr.bf16.mxu0 0
        %986 = vmatpush1.bf16.msra.mxu0 0
        %987 = vmatprep.subr.bf16.mxu0 0
        %988 = vmatpush1.bf16.msra.mxu0 0
        %989 = vmatprep.subr.bf16.mxu0 0
        %990 = vmatpush1.bf16.msra.mxu0 0
        %991 = vmatprep.subr.bf16.mxu0 0
        %992 = vmatpush1.bf16.msra.mxu0 0
        %993 = vmatprep.subr.bf16.mxu0 0
        %994 = vmatpush1.bf16.msra.mxu0 0
        %995 = vmatprep.subr.bf16.mxu0 0
        %996 = vmatpush1.bf16.msra.mxu0 0
        %997 = vmatprep.subr.bf16.mxu0 0
        %998 = vmatpush1.bf16.msra.mxu0 0
        %999 = vmatprep.subr.bf16.mxu0 0
        %1000 = vmatpush1.bf16.msra.mxu0 0
        %1001 = vmatprep.subr.bf16.mxu0 0
        %1002 = vmatpush1.bf16.msra.mxu0 0
        %1003 = vmatprep.subr.bf16.mxu0 0
        %1004 = vmatpush1.bf16.msra.mxu0 0
        %1005 = vmatprep.subr.bf16.mxu0 0
        %1006 = vmatpush1.bf16.msra.mxu0 0
        %1007 = vmatprep.subr.bf16.mxu0 0
        %1008 = vmatpush1.bf16.msra.mxu0 0
        %1009 = vmatprep.subr.bf16.mxu0 0
        %1010 = vmatpush1.bf16.msra.mxu0 0
        %1011 = vmatprep.subr.bf16.mxu0 0
        %1012 = vmatpush1.bf16.msra.mxu0 0
        %1013 = vmatprep.mubr.bf16.mxu0 0
        %1014 = vmatmul.mubr.bf16.gmra.mrb[0].mxu0 %v976
        %v1015 = vpop.f32.mrb[0].mxu0
        %v1016 = vadd.f32 0.0, %v1015
        %v1017 = vpop.f32.mrb[0].mxu0
        %v1018 = vpop.f32.mrb[0].mxu0
        %v1019 = vadd.f32 0.0, %v1018
        %v1020 = vpop.f32.mrb[0].mxu0
        %1021 = vdwg.mxu0
        %v1022 = vadd.f32 %v964, %v1016
        %v1023 = vadd.f32 %v967, %v1019
        %v1024 = vld [vmem:[#allocation3 + $0x6] sm:$0xff]
        %v1025 = vld [vmem:[#allocation3 + $0xe] sm:$0xff]
        %v1026 = vpack.c.bf16 %v1025, %v1024
        %s1027 = scalar_lea.vmem %s3, 6
        %v1028 = vld [vmem:[%s1027] sm:$0x3]
        %v1030 = vsel %vm221, %v1026, 0
        %v1033 = vsel %vm275, %v1028, 0
        %1035 = vmatprep.subr.bf16.mxu0 0
        %1036 = vmatpush1.bf16.msra.mxu0 %v1033
        %1037 = vmatprep.subr.bf16.mxu0 0
        %1038 = vmatpush1.bf16.msra.mxu0 0
        %1039 = vmatprep.subr.bf16.mxu0 0
        %1040 = vmatpush1.bf16.msra.mxu0 0
        %1041 = vmatprep.subr.bf16.mxu0 0
        %1042 = vmatpush1.bf16.msra.mxu0 0
        %1043 = vmatprep.subr.bf16.mxu0 0
        %1044 = vmatpush1.bf16.msra.mxu0 0
        %1045 = vmatprep.subr.bf16.mxu0 0
        %1046 = vmatpush1.bf16.msra.mxu0 0
        %1047 = vmatprep.subr.bf16.mxu0 0
        %1048 = vmatpush1.bf16.msra.mxu0 0
        %1049 = vmatprep.subr.bf16.mxu0 0
        %1050 = vmatpush1.bf16.msra.mxu0 0
        %1051 = vmatprep.subr.bf16.mxu0 0
        %1052 = vmatpush1.bf16.msra.mxu0 0
        %1053 = vmatprep.subr.bf16.mxu0 0
        %1054 = vmatpush1.bf16.msra.mxu0 0
        %1055 = vmatprep.subr.bf16.mxu0 0
        %1056 = vmatpush1.bf16.msra.mxu0 0
        %1057 = vmatprep.subr.bf16.mxu0 0
        %1058 = vmatpush1.bf16.msra.mxu0 0
        %1059 = vmatprep.subr.bf16.mxu0 0
        %1060 = vmatpush1.bf16.msra.mxu0 0
        %1061 = vmatprep.subr.bf16.mxu0 0
        %1062 = vmatpush1.bf16.msra.mxu0 0
        %1063 = vmatprep.subr.bf16.mxu0 0
        %1064 = vmatpush1.bf16.msra.mxu0 0
        %1065 = vmatprep.subr.bf16.mxu0 0
        %1066 = vmatpush1.bf16.msra.mxu0 0
        %1067 = vmatprep.mubr.bf16.mxu0 0
        %1068 = vmatmul.mubr.bf16.gmra.mrb[0].mxu0 %v1030
        %v1069 = vpop.f32.mrb[0].mxu0
        %v1070 = vadd.f32 0.0, %v1069
        %v1071 = vpop.f32.mrb[0].mxu0
        %v1072 = vpop.f32.mrb[0].mxu0
        %v1073 = vadd.f32 0.0, %v1072
        %v1074 = vpop.f32.mrb[0].mxu0
        %1075 = vdwg.mxu0
        %v1076 = vadd.f32 %v1022, %v1070
        %v1077 = vadd.f32 %v1023, %v1073
        %v1078 = vld [vmem:[#allocation3 + $0x7] sm:$0xff]
        %v1079 = vld [vmem:[#allocation3 + $0xf] sm:$0xff]
        %v1080 = vpack.c.bf16 %v1079, %v1078
        %s1081 = scalar_lea.vmem %s3, 8
        %v1082 = vld [vmem:[%s1081] sm:$0x3]
        %v1084 = vsel %vm221, %v1080, 0
        %v1087 = vsel %vm275, %v1082, 0
        %1089 = vmatprep.subr.bf16.mxu0 0
        %1090 = vmatpush1.bf16.msra.mxu0 %v1087
        %1091 = vmatprep.subr.bf16.mxu0 0
        %1092 = vmatpush1.bf16.msra.mxu0 0
        %1093 = vmatprep.subr.bf16.mxu0 0
        %1094 = vmatpush1.bf16.msra.mxu0 0
        %1095 = vmatprep.subr.bf16.mxu0 0
        %1096 = vmatpush1.bf16.msra.mxu0 0
        %1097 = vmatprep.subr.bf16.mxu0 0
        %1098 = vmatpush1.bf16.msra.mxu0 0
        %1099 = vmatprep.subr.bf16.mxu0 0
        %1100 = vmatpush1.bf16.msra.mxu0 0
        %1101 = vmatprep.subr.bf16.mxu0 0
        %1102 = vmatpush1.bf16.msra.mxu0 0
        %1103 = vmatprep.subr.bf16.mxu0 0
        %1104 = vmatpush1.bf16.msra.mxu0 0
        %1105 = vmatprep.subr.bf16.mxu0 0
        %1106 = vmatpush1.bf16.msra.mxu0 0
        %1107 = vmatprep.subr.bf16.mxu0 0
        %1108 = vmatpush1.bf16.msra.mxu0 0
        %1109 = vmatprep.subr.bf16.mxu0 0
        %1110 = vmatpush1.bf16.msra.mxu0 0
        %1111 = vmatprep.subr.bf16.mxu0 0
        %1112 = vmatpush1.bf16.msra.mxu0 0
        %1113 = vmatprep.subr.bf16.mxu0 0
        %1114 = vmatpush1.bf16.msra.mxu0 0
        %1115 = vmatprep.subr.bf16.mxu0 0
        %1116 = vmatpush1.bf16.msra.mxu0 0
        %1117 = vmatprep.subr.bf16.mxu0 0
        %1118 = vmatpush1.bf16.msra.mxu0 0
        %1119 = vmatprep.subr.bf16.mxu0 0
        %1120 = vmatpush1.bf16.msra.mxu0 0
        %1121 = vmatprep.mubr.bf16.mxu0 0
        %1122 = vmatmul.mubr.bf16.gmra.mrb[0].mxu0 %v1084
        %v1123 = vpop.f32.mrb[0].mxu0
        %v1124 = vadd.f32 0.0, %v1123
        %v1125 = vpop.f32.mrb[0].mxu0
        %v1126 = vpop.f32.mrb[0].mxu0
        %v1127 = vadd.f32 0.0, %v1126
        %v1128 = vpop.f32.mrb[0].mxu0
        %1129 = vdwg.mxu0
        %v1130 = vadd.f32 %v1076, %v1124
        %v1131 = vadd.f32 %v1077, %v1127
        %v1132 = vld [vmem:[#allocation3 + $0x8] sm:$0xff]
        %v1133 = vld [vmem:[#allocation3 + $0x10] sm:$0xff]
        %v1134 = vpack.c.bf16 %v1133, %v1132
        %s1135 = scalar_lea.vmem %s3, 10
        %v1136 = vld [vmem:[%s1135] sm:$0x3]
        %v1138 = vsel %vm221, %v1134, 0
        %v1141 = vsel %vm275, %v1136, 0
        %1143 = vmatprep.subr.bf16.mxu0 0
        %1144 = vmatpush1.bf16.msra.mxu0 %v1141
        %1145 = vmatprep.subr.bf16.mxu0 0
        %1146 = vmatpush1.bf16.msra.mxu0 0
        %1147 = vmatprep.subr.bf16.mxu0 0
        %1148 = vmatpush1.bf16.msra.mxu0 0
        %1149 = vmatprep.subr.bf16.mxu0 0
        %1150 = vmatpush1.bf16.msra.mxu0 0
        %1151 = vmatprep.subr.bf16.mxu0 0
        %1152 = vmatpush1.bf16.msra.mxu0 0
        %1153 = vmatprep.subr.bf16.mxu0 0
        %1154 = vmatpush1.bf16.msra.mxu0 0
        %1155 = vmatprep.subr.bf16.mxu0 0
        %1156 = vmatpush1.bf16.msra.mxu0 0
        %1157 = vmatprep.subr.bf16.mxu0 0
        %1158 = vmatpush1.bf16.msra.mxu0 0
        %1159 = vmatprep.subr.bf16.mxu0 0
        %1160 = vmatpush1.bf16.msra.mxu0 0
        %1161 = vmatprep.subr.bf16.mxu0 0
        %1162 = vmatpush1.bf16.msra.mxu0 0
        %1163 = vmatprep.subr.bf16.mxu0 0
        %1164 = vmatpush1.bf16.msra.mxu0 0
        %1165 = vmatprep.subr.bf16.mxu0 0
        %1166 = vmatpush1.bf16.msra.mxu0 0
        %1167 = vmatprep.subr.bf16.mxu0 0
        %1168 = vmatpush1.bf16.msra.mxu0 0
        %1169 = vmatprep.subr.bf16.mxu0 0
        %1170 = vmatpush1.bf16.msra.mxu0 0
        %1171 = vmatprep.subr.bf16.mxu0 0
        %1172 = vmatpush1.bf16.msra.mxu0 0
        %1173 = vmatprep.subr.bf16.mxu0 0
        %1174 = vmatpush1.bf16.msra.mxu0 0
        %1175 = vmatprep.mubr.bf16.mxu0 0
        %1176 = vmatmul.mubr.bf16.gmra.mrb[0].mxu0 %v1138
        %v1177 = vpop.f32.mrb[0].mxu0
        %v1178 = vadd.f32 0.0, %v1177
        %v1179 = vpop.f32.mrb[0].mxu0
        %v1180 = vpop.f32.mrb[0].mxu0
        %v1181 = vadd.f32 0.0, %v1180
        %v1182 = vpop.f32.mrb[0].mxu0
        %1183 = vdwg.mxu0
        %v1184 = vadd.f32 %v1130, %v1178
        %v1185 = vadd.f32 %v1131, %v1181
        %v1186 = vld [vmem:[#allocation3 + $0x9] sm:$0xff]
        %v1187 = vld [vmem:[#allocation3 + $0x11] sm:$0xff]
        %v1188 = vpack.c.bf16 %v1187, %v1186
        %s1189 = scalar_lea.vmem %s3, 12
        %v1190 = vld [vmem:[%s1189] sm:$0x3]
        %v1192 = vsel %vm221, %v1188, 0
        %v1195 = vsel %vm275, %v1190, 0
        %1197 = vmatprep.subr.bf16.mxu0 0
        %1198 = vmatpush1.bf16.msra.mxu0 %v1195
        %1199 = vmatprep.subr.bf16.mxu0 0
        %1200 = vmatpush1.bf16.msra.mxu0 0
        %1201 = vmatprep.subr.bf16.mxu0 0
        %1202 = vmatpush1.bf16.msra.mxu0 0
        %1203 = vmatprep.subr.bf16.mxu0 0
        %1204 = vmatpush1.bf16.msra.mxu0 0
        %1205 = vmatprep.subr.bf16.mxu0 0
        %1206 = vmatpush1.bf16.msra.mxu0 0
        %1207 = vmatprep.subr.bf16.mxu0 0
        %1208 = vmatpush1.bf16.msra.mxu0 0
        %1209 = vmatprep.subr.bf16.mxu0 0
        %1210 = vmatpush1.bf16.msra.mxu0 0
        %1211 = vmatprep.subr.bf16.mxu0 0
        %1212 = vmatpush1.bf16.msra.mxu0 0
        %1213 = vmatprep.subr.bf16.mxu0 0
        %1214 = vmatpush1.bf16.msra.mxu0 0
        %1215 = vmatprep.subr.bf16.mxu0 0
        %1216 = vmatpush1.bf16.msra.mxu0 0
        %1217 = vmatprep.subr.bf16.mxu0 0
        %1218 = vmatpush1.bf16.msra.mxu0 0
        %1219 = vmatprep.subr.bf16.mxu0 0
        %1220 = vmatpush1.bf16.msra.mxu0 0
        %1221 = vmatprep.subr.bf16.mxu0 0
        %1222 = vmatpush1.bf16.msra.mxu0 0
        %1223 = vmatprep.subr.bf16.mxu0 0
        %1224 = vmatpush1.bf16.msra.mxu0 0
        %1225 = vmatprep.subr.bf16.mxu0 0
        %1226 = vmatpush1.bf16.msra.mxu0 0
        %1227 = vmatprep.subr.bf16.mxu0 0
        %1228 = vmatpush1.bf16.msra.mxu0 0
        %1229 = vmatprep.mubr.bf16.mxu0 0
        %1230 = vmatmul.mubr.bf16.gmra.mrb[0].mxu0 %v1192
        %v1231 = vpop.f32.mrb[0].mxu0
        %v1232 = vadd.f32 0.0, %v1231
        %v1233 = vpop.f32.mrb[0].mxu0
        %v1234 = vpop.f32.mrb[0].mxu0
        %v1235 = vadd.f32 0.0, %v1234
        %v1236 = vpop.f32.mrb[0].mxu0
        %1237 = vdwg.mxu0
        %v1238 = vadd.f32 %v1184, %v1232
        %v1239 = vadd.f32 %v1185, %v1235
        %v1240 = vld [vmem:[#allocation3 + $0xa] sm:$0xff]
        %v1241 = vld [vmem:[#allocation3 + $0x12] sm:$0xff]
        %v1242 = vpack.c.bf16 %v1241, %v1240
        %s1243 = scalar_lea.vmem %s3, 14
        %v1244 = vld [vmem:[%s1243] sm:$0x3]
        %v1246 = vsel %vm221, %v1242, 0
        %v1249 = vsel %vm275, %v1244, 0
        %1251 = vmatprep.subr.bf16.mxu0 0
        %1252 = vmatpush1.bf16.msra.mxu0 %v1249
        %1253 = vmatprep.subr.bf16.mxu0 0
        %1254 = vmatpush1.bf16.msra.mxu0 0
        %1255 = vmatprep.subr.bf16.mxu0 0
        %1256 = vmatpush1.bf16.msra.mxu0 0
        %1257 = vmatprep.subr.bf16.mxu0 0
        %1258 = vmatpush1.bf16.msra.mxu0 0
        %1259 = vmatprep.subr.bf16.mxu0 0
        %1260 = vmatpush1.bf16.msra.mxu0 0
        %1261 = vmatprep.subr.bf16.mxu0 0
        %1262 = vmatpush1.bf16.msra.mxu0 0
        %1263 = vmatprep.subr.bf16.mxu0 0
        %1264 = vmatpush1.bf16.msra.mxu0 0
        %1265 = vmatprep.subr.bf16.mxu0 0
        %1266 = vmatpush1.bf16.msra.mxu0 0
        %1267 = vmatprep.subr.bf16.mxu0 0
        %1268 = vmatpush1.bf16.msra.mxu0 0
        %1269 = vmatprep.subr.bf16.mxu0 0
        %1270 = vmatpush1.bf16.msra.mxu0 0
        %1271 = vmatprep.subr.bf16.mxu0 0
        %1272 = vmatpush1.bf16.msra.mxu0 0
        %1273 = vmatprep.subr.bf16.mxu0 0
        %1274 = vmatpush1.bf16.msra.mxu0 0
        %1275 = vmatprep.subr.bf16.mxu0 0
        %1276 = vmatpush1.bf16.msra.mxu0 0
        %1277 = vmatprep.subr.bf16.mxu0 0
        %1278 = vmatpush1.bf16.msra.mxu0 0
        %1279 = vmatprep.subr.bf16.mxu0 0
        %1280 = vmatpush1.bf16.msra.mxu0 0
        %1281 = vmatprep.subr.bf16.mxu0 0
        %1282 = vmatpush1.bf16.msra.mxu0 0
        %1283 = vmatprep.mubr.bf16.mxu0 0
        %1284 = vmatmul.mubr.bf16.gmra.mrb[0].mxu0 %v1246
        %v1285 = vpop.f32.mrb[0].mxu0
        %v1286 = vadd.f32 0.0, %v1285
        %v1287 = vpop.f32.mrb[0].mxu0
        %v1288 = vpop.f32.mrb[0].mxu0
        %v1289 = vadd.f32 0.0, %v1288
        %v1290 = vpop.f32.mrb[0].mxu0
        %1291 = vdwg.mxu0
        %v1292 = vadd.f32 %v1238, %v1286
        %v1293 = vadd.f32 %v1239, %v1289
        %v1294 = vld [vmem:[#allocation3 + $0xb] sm:$0xff]
        %v1295 = vld [vmem:[#allocation3 + $0x13] sm:$0xff]
        %v1296 = vpack.c.bf16 %v1295, %v1294
        %s1297 = scalar_lea.vmem %s3, 16
        %v1298 = vld [vmem:[%s1297] sm:$0x3]
        %v1300 = vsel %vm221, %v1296, 0
        %v1303 = vsel %vm275, %v1298, 0
        %1305 = vmatprep.subr.bf16.mxu0 0
        %1306 = vmatpush1.bf16.msra.mxu0 %v1303
        %1307 = vmatprep.subr.bf16.mxu0 0
        %1308 = vmatpush1.bf16.msra.mxu0 0
        %1309 = vmatprep.subr.bf16.mxu0 0
        %1310 = vmatpush1.bf16.msra.mxu0 0
        %1311 = vmatprep.subr.bf16.mxu0 0
        %1312 = vmatpush1.bf16.msra.mxu0 0
        %1313 = vmatprep.subr.bf16.mxu0 0
        %1314 = vmatpush1.bf16.msra.mxu0 0
        %1315 = vmatprep.subr.bf16.mxu0 0
        %1316 = vmatpush1.bf16.msra.mxu0 0
        %1317 = vmatprep.subr.bf16.mxu0 0
        %1318 = vmatpush1.bf16.msra.mxu0 0
        %1319 = vmatprep.subr.bf16.mxu0 0
        %1320 = vmatpush1.bf16.msra.mxu0 0
        %1321 = vmatprep.subr.bf16.mxu0 0
        %1322 = vmatpush1.bf16.msra.mxu0 0
        %1323 = vmatprep.subr.bf16.mxu0 0
        %1324 = vmatpush1.bf16.msra.mxu0 0
        %1325 = vmatprep.subr.bf16.mxu0 0
        %1326 = vmatpush1.bf16.msra.mxu0 0
        %1327 = vmatprep.subr.bf16.mxu0 0
        %1328 = vmatpush1.bf16.msra.mxu0 0
        %1329 = vmatprep.subr.bf16.mxu0 0
        %1330 = vmatpush1.bf16.msra.mxu0 0
        %1331 = vmatprep.subr.bf16.mxu0 0
        %1332 = vmatpush1.bf16.msra.mxu0 0
        %1333 = vmatprep.subr.bf16.mxu0 0
        %1334 = vmatpush1.bf16.msra.mxu0 0
        %1335 = vmatprep.subr.bf16.mxu0 0
        %1336 = vmatpush1.bf16.msra.mxu0 0
        %1337 = vmatprep.mubr.bf16.mxu0 0
        %1338 = vmatmul.mubr.bf16.gmra.mrb[0].mxu0 %v1300
        %v1339 = vpop.f32.mrb[0].mxu0
        %v1340 = vadd.f32 0.0, %v1339
        %v1341 = vpop.f32.mrb[0].mxu0
        %v1342 = vpop.f32.mrb[0].mxu0
        %v1343 = vadd.f32 0.0, %v1342
        %v1344 = vpop.f32.mrb[0].mxu0
        %1345 = vdwg.mxu0
        %v1346 = vadd.f32 %v1292, %v1340
        %v1347 = vadd.f32 %v1293, %v1343
        %v1348 = vld [vmem:[%s4] sm:$0x1]
        %v1350 = vlaneseq
        %v1351 = vshrl.u32 %v1350, 7
        %v1352 = vsub.s32 0, %v1351
        %v1353 = vrot.slane %v1348, %v1352
        %v1355 = vadd.f32 %v1346, %v1353
        %v1356 = vadd.f32 %v1347, %v1353
        %v1357 = vld [vmem:[#allocation2 + $0x8] sm:$0xff]
        %v1358 = vld [vmem:[#allocation2 + $0x10] sm:$0xff]
        %v1359 = vadd.f32 %v1357, %v1355
        %v1360 = vadd.f32 %v1358, %v1356
        %v1361 = vmax.f32 %v1359, 0.0
        %v1362 = vmax.f32 %v1360, 0.0
        %1363 = vxpose.xlu0.b32.start [1/16] %v1361, 128
        %1364 = vxpose.xlu0.b32.cont [2/16] %v1362, 128
        %1365 = vxpose.xlu0.b32.cont [3/16] 0.0, 128
        %1366 = vxpose.xlu0.b32.cont [4/16] 0.0, 128
        %1367 = vxpose.xlu0.b32.cont [5/16] 0.0, 128
        %1368 = vxpose.xlu0.b32.cont [6/16] 0.0, 128
        %1369 = vxpose.xlu0.b32.cont [7/16] 0.0, 128
        %1370 = vxpose.xlu0.b32.cont [8/16] 0.0, 128
        %1371 = vxpose.xlu0.b32.cont [9/16] 0.0, 128
        %1372 = vxpose.xlu0.b32.cont [10/16] 0.0, 128
        %1373 = vxpose.xlu0.b32.cont [11/16] 0.0, 128
        %1374 = vxpose.xlu0.b32.cont [12/16] 0.0, 128
        %1375 = vxpose.xlu0.b32.cont [13/16] 0.0, 128
        %1376 = vxpose.xlu0.b32.cont [14/16] 0.0, 128
        %1377 = vxpose.xlu0.b32.cont [15/16] 0.0, 128
        %1378 = vxpose.xlu0.b32.end [16/16] 0.0, 128
        %v1379 = vpop.trf.xlu0
        %v1380 = vpop.trf.xlu0
        %v1381 = vpop.trf.xlu0
        %v1382 = vpop.trf.xlu0
        %v1383 = vpop.trf.xlu0
        %v1384 = vpop.trf.xlu0
        %v1385 = vpop.trf.xlu0
        %v1386 = vpop.trf.xlu0
        %v1387 = vpop.trf.xlu0
        %v1388 = vpop.trf.xlu0
        %v1389 = vpop.trf.xlu0
        %v1390 = vpop.trf.xlu0
        %v1391 = vpop.trf.xlu0
        %v1392 = vpop.trf.xlu0
        %v1393 = vpop.trf.xlu0
        %v1394 = vpop.trf.xlu0
        %vm1395 = vcmask 125952
        %1396 = vst.msk [vmem:[%s215] sm:$0xf] %vm1395, %v1379
        %s1397 = sand.u32 %s137, 1
        %s1398 = scalar_lea.sflag [#allocation5], %s1397
        %s1399 = sand.u32 %s137, 1
        %s1400 = smul.addr %s1399, 4
        %s1401 = scalar_lea.vmem [#allocation4], %s1400
        // Predicated region
        $region41: #{tpu_custom_call.1} parent=39 // pred_check
          %p1402 = pneg %p147
        $region42: #{tpu_custom_call.1} parent=39 // pred_check_branch
          %1404 = sbr.rel (%p1402) target = $region44
        $region43: #{tpu_custom_call.1} parent=39 // pred_region
          %s1406 = ssub.s32 64, 64
          %1407 = vsyncadd %s1398, %s1406
          %s1408 = smul.addr %s19, 64
          %s1409 = scalar_lea.hbm %s5, %s1408
          %s1411 = sshll.u32 %s1401, 4
          %s1412 = int_to_ptr.vmem [resolvable:$true] %s1411
          %1414 = dma.vmem_to_hbm [thread:$0]  %s1412, 64, %s1409, %s1398
        $region44: #{tpu_custom_call.1} parent=39 // pred_fallthru
          _
      $region40: #{tpu_custom_call.1} parent=5 // pred_fallthru
        _
      %p1415 = scmp.le.s32.totalorder 2, %s14
      // Predicated region
      $region45: #{tpu_custom_call.1} parent=5 // pred_check
        %p1416 = pneg %p1415
      $region46: #{tpu_custom_call.1} parent=5 // pred_check_branch
        %1418 = sbr.rel (%p1416) target = $region48
      $region47: #{tpu_custom_call.1} parent=5 // pred_region
        %s1419 = ssub.s32 %s14, 2
        // Predicated region
        $region49: #{tpu_custom_call.1} parent=47 // pred_check
          %p1420 = pneg %p153
        $region50: #{tpu_custom_call.1} parent=47 // pred_check_branch
          %1422 = sbr.rel (%p1420) target = $region52
        $region51: #{tpu_custom_call.1} parent=47 // pred_region
          %s1423 = sand.u32 %s138, 1
          %s1424 = scalar_lea.sflag [#allocation5], %s1423
          %s1425 = sand.u32 %s138, 1
          %s1426 = smul.addr %s1425, 4
          %s1427 = scalar_lea.vmem [#allocation4], %s1426
          %1428 = dma.done %s1424, 64
        $region52: #{tpu_custom_call.1} parent=47 // pred_fallthru
          _
      $region48: #{tpu_custom_call.1} parent=5 // pred_fallthru
        _
    $region6: #{tpu_custom_call.1} parent=1 // loop_footer
      %s18 = sadd.s32 1, %s14
    $region7: #{tpu_custom_call.1} parent=1 // loop_footer_branch
      %13 = sbr.rel target = $region3
    $region8: #{tpu_custom_call.1} parent=1 // loop_exit
      _
    %1429 = vsyncpa [#allocation5], 1
    %s1430 = scalar_lea.sflag [#allocation5], 1
    %1431 = vsyncpa %s1430, 1

</llo_original>
